<compile_context>
chip_gen: v7x
topology: tpu7x:2x2x1
jax: 0.10.0
libtpu: 0.0.40
codegen_flags: <defaults>
</compile_context>

<pallas_src>
import jax
import jax.numpy as jnp
from jax import lax
from jax.experimental import pallas as pl
from jax.experimental.pallas import tpu as pltpu


def _make_kernel(N: int, M: int):
    def kernel(x1_ref, x2_ref, x3_ref, w1_ref, b1_ref, w23_hbm, b23_ref,
               o_ref, w23_vmem, w23_sem, v5_buf):
        # Kick off the fused-output-weight DMA immediately; it is only needed
        # by the final GEMM, so it overlaps with d1 / scores / softmax / v5.
        w23_copy = pltpu.make_async_copy(w23_hbm, w23_vmem, w23_sem)
        w23_copy.start()

        # d1 linear (the N^-0.5 softmax scale is already folded into w1/b1).
        v1 = (jnp.dot(x1_ref[...], w1_ref[...],
                      preferred_element_type=jnp.float32)
              + b1_ref[...])                                          # (S, D)

        # Scores for all batches at once, contracting D on both operands
        # (avoids materializing v1.T through the XLU).
        s = lax.dot_general(
            x2_ref[...], v1,
            dimension_numbers=(((1,), (1,)), ((), ())),
            preferred_element_type=jnp.float32)                       # (N*M, S)

        # softmax over the last axis (matches torch.softmax(dim=-1)).
        # Exact division: the approx-EUP reciprocal bought nothing here.
        m = jnp.max(s, axis=-1, keepdims=True)
        e = jnp.exp(s - m)
        p = e / jnp.sum(e, axis=-1, keepdims=True)                    # (N*M, S)

        # v5[n] = p[n] @ x3[n]; N is tiny, so unroll the batch statically and
        # write each result directly into a (N*M, D) VMEM slab (no concat).
        for n in range(N):
            v5_buf[n * M:(n + 1) * M, :] = jnp.dot(
                p[n * M:(n + 1) * M, :], x3_ref[n],
                preferred_element_type=jnp.float32)                   # (M, D)

        # Fused d2∘d3: one tall GEMM against the pre-fused weight.
        w23_copy.wait()
        v7 = jnp.dot(v5_buf[...], w23_vmem[...],
                     preferred_element_type=jnp.float32) + b23_ref[...]

        # Lane-dense full-slab store (64 x 512 f32).
        o_ref[...] = v7.astype(o_ref.dtype)

    return kernel


def fuse_params(params, N):
    """One-time prep (weights are static): fold the softmax scale into d1 and
    fuse d2∘d3 into a single weight/bias pair."""
    w1t, b1, w2t, b2, w3t, b3 = params
    scale = float(N) ** (-0.5)
    hi = lax.Precision.HIGHEST
    w1s = w1t * scale                                   # (D, D)
    b1s = b1 * scale                                    # (1, D)
    w23 = jnp.dot(w2t, w3t, precision=hi)               # (D, D)
    b23 = jnp.dot(b2, w3t, precision=hi) + b3           # (1, D)
    return w1s, b1s, w23, b23


def model_forward(x1, x2, x3, fused_params):
    """x1: (S, D), x2: (N, M, D), x3: (N, S, D)  ->  (N, M, D)"""
    w1s, b1s, w23, b23 = fused_params
    N, M, D = x2.shape
    S = x1.shape[0]

    # Flatten the batch so scores and the fused output GEMM run as single
    # tall, lane-dense GEMMs (D = 512 = 4*128 lanes, N*M = 64 sublanes).
    x2_flat = x2.reshape(N * M, D)

    flops = int(2 * S * D * D            # d1
                + 2 * (N * M) * S * D    # scores
                + 2 * N * M * S * D      # v5
                + 2 * (N * M) * D * D)   # fused d2∘d3
    bytes_accessed = int(sum(int(a.size) * int(a.dtype.itemsize)
                             for a in (x1, x2_flat, x3, w1s, b1s, w23, b23))
                         + N * M * D * 4)                # output
    transcendentals = int(N * M * S)                     # softmax exp

    vmem = pltpu.MemorySpace.VMEM
    out_flat = pl.pallas_call(
        _make_kernel(N, M),
        out_shape=jax.ShapeDtypeStruct((N * M, D), x2.dtype),
        in_specs=[
            pl.BlockSpec(memory_space=vmem),    # x1
            pl.BlockSpec(memory_space=vmem),    # x2 (flattened)
            pl.BlockSpec(memory_space=vmem),    # x3
            pl.BlockSpec(memory_space=vmem),    # w1 (scale folded)
            pl.BlockSpec(memory_space=vmem),    # b1 (scale folded)
            pl.BlockSpec(memory_space=pl.ANY),  # w23: stays in HBM, manual DMA
            pl.BlockSpec(memory_space=vmem),    # b23
        ],
        out_specs=pl.BlockSpec(memory_space=vmem),
        scratch_shapes=[
            pltpu.VMEM((D, D), jnp.float32),        # w23 landing buffer
            pltpu.SemaphoreType.DMA,                # w23 copy completion
            pltpu.VMEM((N * M, D), jnp.float32),    # v5 slab
        ],
        cost_estimate=pl.CostEstimate(flops=flops,
                                      transcendentals=transcendentals,
                                      bytes_accessed=bytes_accessed),
    )(x1, x2_flat, x3, w1s, b1s, w23, b23)

    return out_flat.reshape(N, M, D)


def _reference(x1, x2, x3, params, N):
    w1t, b1, w2t, b2, w3t, b3 = params
    with jax.default_matmul_precision("highest"):
        v1 = x1 @ w1t + b1
        v2 = jnp.einsum("nmd,sd->nms", x2, v1)
        v3 = v2 * (float(N) ** -0.5)
        v4 = jax.nn.softmax(v3, axis=-1)
        v5 = jnp.einsum("nms,nsd->nmd", v4, x3)
        v6 = v5 @ w2t + b2
        v7 = v6 @ w3t + b3
    return v7


if __name__ == "__main__":
    # Module's D=512, N=2; consistent small S=M=32 (the literal fuzzer shapes
    # do not contract).  All dims are (8,128)-friendly: lane dim D=512.
    N, D, S, M = 2, 512, 32, 32

    key = jax.random.PRNGKey(0)
    ks = jax.random.split(key, 9)

    x1 = jax.random.normal(ks[0], (S, D), jnp.float32)
    x2 = jax.random.normal(ks[1], (N, M, D), jnp.float32)
    x3 = jax.random.normal(ks[2], (N, S, D), jnp.float32)

    # nn.Linear-style uniform init; weights stored pre-transposed as (in, out),
    # biases as (1, D) for clean 2-D broadcasting on TPU.
    bound = 1.0 / (D ** 0.5)
    w1t = jax.random.uniform(ks[3], (D, D), jnp.float32, -bound, bound)
    b1 = jax.random.uniform(ks[4], (1, D), jnp.float32, -bound, bound)
    w2t = jax.random.uniform(ks[5], (D, D), jnp.float32, -bound, bound)
    b2 = jax.random.uniform(ks[6], (1, D), jnp.float32, -bound, bound)
    w3t = jax.random.uniform(ks[7], (D, D), jnp.float32, -bound, bound)
    b3 = jax.random.uniform(ks[8], (1, D), jnp.float32, -bound, bound)
    params = (w1t, b1, w2t, b2, w3t, b3)

    fused = fuse_params(params, N)
    out = model_forward(x1, x2, x3, fused)
    out = jax.block_until_ready(out)

    ref = _reference(x1, x2, x3, params, N)
    assert out.shape == (N, M, D)
    # Tolerance covers MXU f32-pass rounding and the (mathematically exact)
    # d2∘d3 weight-fusion reassociation; softmax now uses an exact divide.
    assert jnp.allclose(out, ref, atol=5e-3, rtol=5e-3), \
        float(jnp.max(jnp.abs(out - ref)))

    print("KERNEL_OK")
</pallas_src>

<mosaic_0001>
module attributes {stable_mosaic.version = 11 : i64} {
  func.func @kernel(%arg0: memref<32x512xf32, #tpu.memory_space<vmem>>, %arg1: memref<64x512xf32, #tpu.memory_space<vmem>>, %arg2: memref<2x32x512xf32, #tpu.memory_space<vmem>>, %arg3: memref<512x512xf32, #tpu.memory_space<vmem>>, %arg4: memref<1x512xf32, #tpu.memory_space<vmem>>, %arg5: memref<512x512xf32, #tpu.memory_space<any>>, %arg6: memref<1x512xf32, #tpu.memory_space<vmem>>, %arg7: memref<64x512xf32, #tpu.memory_space<vmem>>, %arg8: memref<512x512xf32, #tpu.memory_space<vmem>>, %arg9: memref<!tpu.dma_semaphore, #tpu.memory_space<semaphore_mem>>, %arg10: memref<64x512xf32, #tpu.memory_space<vmem>>) attributes {dimension_semantics = [], scalar_prefetch = 0 : i64, scratch_operands = 3 : i64, tpu.core_type = #tpu.core_type<tc>} {
    tpu.enqueue_dma source(%arg5 : memref<512x512xf32, #tpu.memory_space<any>>) target(%arg8 : memref<512x512xf32, #tpu.memory_space<vmem>>) target_semaphore(%arg9 : memref<!tpu.dma_semaphore, #tpu.memory_space<semaphore_mem>>)
    %c0 = arith.constant 0 : index
    %c0_0 = arith.constant 0 : index
    %0 = vector.load %arg0[%c0, %c0_0] : memref<32x512xf32, #tpu.memory_space<vmem>>, vector<32x512xf32>
    %c0_1 = arith.constant 0 : index
    %c0_2 = arith.constant 0 : index
    %1 = vector.load %arg3[%c0_1, %c0_2] : memref<512x512xf32, #tpu.memory_space<vmem>>, vector<512x512xf32>
    %cst = arith.constant dense<0.000000e+00> : vector<32x512xf32>
    %2 = tpu.matmul %0, %1, %cst {dimension_numbers = #tpu.dot_dimension_numbers<[1], [0], [0], [1], [0, 0, 1, 1], [], []>} : vector<32x512xf32>, vector<512x512xf32>, vector<32x512xf32> -> vector<32x512xf32>
    %c0_3 = arith.constant 0 : index
    %c0_4 = arith.constant 0 : index
    %3 = vector.load %arg4[%c0_3, %c0_4] : memref<1x512xf32, #tpu.memory_space<vmem>>, vector<1x512xf32>
    %4 = vector.broadcast %3 : vector<1x512xf32> to vector<32x512xf32>
    %5 = arith.addf %2, %4 : vector<32x512xf32>
    %c0_5 = arith.constant 0 : index
    %c0_6 = arith.constant 0 : index
    %6 = vector.load %arg1[%c0_5, %c0_6] : memref<64x512xf32, #tpu.memory_space<vmem>>, vector<64x512xf32>
    %cst_7 = arith.constant dense<0.000000e+00> : vector<64x32xf32>
    %7 = tpu.matmul %6, %5, %cst_7 {dimension_numbers = #tpu.dot_dimension_numbers<[1], [1], [0], [0], [0, 0, 1, 0], [], []>} : vector<64x512xf32>, vector<32x512xf32>, vector<64x32xf32> -> vector<64x32xf32>
    %cst_8 = arith.constant dense<0xFF800000> : vector<64xf32>
    %8 = vector.multi_reduction <maximumf>, %7, %cst_8 [1] : vector<64x32xf32> to vector<64xf32>
    %9 = vector.shape_cast %8 : vector<64xf32> to vector<64x1xf32>
    %10 = vector.broadcast %9 : vector<64x1xf32> to vector<64x32xf32>
    %11 = arith.subf %7, %10 : vector<64x32xf32>
    %12 = math.exp %11 : vector<64x32xf32>
    %cst_9 = arith.constant dense<0.000000e+00> : vector<64xf32>
    %13 = vector.multi_reduction <add>, %12, %cst_9 [1] : vector<64x32xf32> to vector<64xf32>
    %14 = vector.shape_cast %13 : vector<64xf32> to vector<64x1xf32>
    %15 = vector.broadcast %14 : vector<64x1xf32> to vector<64x32xf32>
    %16 = arith.divf %12, %15 : vector<64x32xf32>
    %17 = vector.extract_strided_slice %16 {offsets = [0, 0], sizes = [32, 32], strides = [1, 1]} : vector<64x32xf32> to vector<32x32xf32>
    %c0_10 = arith.constant 0 : index
    %c0_11 = arith.constant 0 : index
    %c0_12 = arith.constant 0 : index
    %18 = vector.load %arg2[%c0_10, %c0_11, %c0_12] : memref<2x32x512xf32, #tpu.memory_space<vmem>>, vector<1x32x512xf32>
    %19 = vector.shape_cast %18 : vector<1x32x512xf32> to vector<32x512xf32>
    %cst_13 = arith.constant dense<0.000000e+00> : vector<32x512xf32>
    %20 = tpu.matmul %17, %19, %cst_13 {dimension_numbers = #tpu.dot_dimension_numbers<[1], [0], [0], [1], [0, 0, 1, 1], [], []>} : vector<32x32xf32>, vector<32x512xf32>, vector<32x512xf32> -> vector<32x512xf32>
    %c0_14 = arith.constant 0 : index
    %c0_15 = arith.constant 0 : index
    %21 = vector.load %arg10[%c0_14, %c0_15] : memref<64x512xf32, #tpu.memory_space<vmem>>, vector<32x512xf32>
    tpu.vector_store %arg10[%c0_14, %c0_15], %20 {strides = array<i32>} : memref<64x512xf32, #tpu.memory_space<vmem>>, vector<32x512xf32>,
    %22 = vector.extract_strided_slice %16 {offsets = [32, 0], sizes = [32, 32], strides = [1, 1]} : vector<64x32xf32> to vector<32x32xf32>
    %c1 = arith.constant 1 : index
    %c0_16 = arith.constant 0 : index
    %c0_17 = arith.constant 0 : index
    %23 = vector.load %arg2[%c1, %c0_16, %c0_17] : memref<2x32x512xf32, #tpu.memory_space<vmem>>, vector<1x32x512xf32>
    %24 = vector.shape_cast %23 : vector<1x32x512xf32> to vector<32x512xf32>
    %cst_18 = arith.constant dense<0.000000e+00> : vector<32x512xf32>
    %25 = tpu.matmul %22, %24, %cst_18 {dimension_numbers = #tpu.dot_dimension_numbers<[1], [0], [0], [1], [0, 0, 1, 1], [], []>} : vector<32x32xf32>, vector<32x512xf32>, vector<32x512xf32> -> vector<32x512xf32>
    %c32 = arith.constant 32 : index
    %c0_19 = arith.constant 0 : index
    %26 = vector.load %arg10[%c32, %c0_19] : memref<64x512xf32, #tpu.memory_space<vmem>>, vector<32x512xf32>
    tpu.vector_store %arg10[%c32, %c0_19], %25 {strides = array<i32>} : memref<64x512xf32, #tpu.memory_space<vmem>>, vector<32x512xf32>,
    tpu.wait_dma2 semaphore(%arg9 : memref<!tpu.dma_semaphore, #tpu.memory_space<semaphore_mem>>) src(%arg5 : memref<512x512xf32, #tpu.memory_space<any>>) dst(%arg8 : memref<512x512xf32, #tpu.memory_space<vmem>>)
    %c0_20 = arith.constant 0 : index
    %c0_21 = arith.constant 0 : index
    %27 = vector.load %arg10[%c0_20, %c0_21] : memref<64x512xf32, #tpu.memory_space<vmem>>, vector<64x512xf32>
    %c0_22 = arith.constant 0 : index
    %c0_23 = arith.constant 0 : index
    %28 = vector.load %arg8[%c0_22, %c0_23] : memref<512x512xf32, #tpu.memory_space<vmem>>, vector<512x512xf32>
    %cst_24 = arith.constant dense<0.000000e+00> : vector<64x512xf32>
    %29 = tpu.matmul %27, %28, %cst_24 {dimension_numbers = #tpu.dot_dimension_numbers<[1], [0], [0], [1], [0, 0, 1, 1], [], []>} : vector<64x512xf32>, vector<512x512xf32>, vector<64x512xf32> -> vector<64x512xf32>
    %c0_25 = arith.constant 0 : index
    %c0_26 = arith.constant 0 : index
    %30 = vector.load %arg6[%c0_25, %c0_26] : memref<1x512xf32, #tpu.memory_space<vmem>>, vector<1x512xf32>
    %31 = vector.broadcast %30 : vector<1x512xf32> to vector<64x512xf32>
    %32 = arith.addf %29, %31 : vector<64x512xf32>
    %c0_27 = arith.constant 0 : index
    %c0_28 = arith.constant 0 : index
    %33 = vector.load %arg7[%c0_27, %c0_28] : memref<64x512xf32, #tpu.memory_space<vmem>>, vector<64x512xf32>
    tpu.vector_store %arg7[%c0_27, %c0_28], %32 {strides = array<i32>} : memref<64x512xf32, #tpu.memory_space<vmem>>, vector<64x512xf32>,
    return
  }
}

</mosaic_0001>

<llo_original>
// kernel: tpu_custom_call.1
$region0: #{tpu_custom_call.1}
  #allocation0 [shape = 'u32[]', space=smem, size = 0x4, offset = 0x4, fixed_abs, tag = 'smem constant byte address 0x4 - core index']
  #allocation1 [shape = 'u32[144,128]{1,0:T(1,128)}', space=vmem, size = 0x12000, scoped, tag = 'internal scratch']
  #allocation2 [shape = 'f32[512,512]{1,0:T(8,128)}', space=vmem, size = 0x100000, scoped, tag = 'scratch operand']
  #allocation3 [shape = 's32[1]{0}', space=sflag, size = 0x4, scoped, tag = 'scratch operand']
  #allocation4 [shape = 'f32[64,512]{1,0:T(8,128)}', space=vmem, size = 0x20000, scoped, tag = 'scratch operand']
  #allocation14 [shape = 's32[]', space=sflag, size = 0x4, offset = 0, fixed_abs, tag = 'sflag constant byte address 0x0 - dummy sync flag']
  #allocation15 [shape = 's32[]', space=sflag, size = 0x4, offset = 0, fixed_abs, tag = 'sflag constant byte address 0x0 - dummy sync flag']
  #allocation16 [shape = 'u32[]', space=smem, size = 0x4, offset = 0x44, fixed_abs, tag = 'smem constant byte address 0x44 - assertion arg 0']
  #allocation17 [shape = 'u32[]', space=smem, size = 0x4, offset = 0x48, fixed_abs, tag = 'smem constant byte address 0x48 - assertion arg 1']
  %s0 = inlined_call_operand.hbm [shape: f32[32,512], index: 0, kind: input, shape index: {}]
  %s1 = inlined_call_operand.hbm [shape: f32[64,512], index: 1, kind: input, shape index: {}]
  %s2 = inlined_call_operand.hbm [shape: f32[2,32,512], index: 2, kind: input, shape index: {}]
  %s3 = inlined_call_operand.hbm [shape: f32[512,512], index: 3, kind: input, shape index: {}]
  %s4 = inlined_call_operand.vmem [shape: f32[1,512], index: 4, kind: input, shape index: {}]
  %s5 = inlined_call_operand.hbm [shape: f32[512,512], index: 5, kind: input, shape index: {}]
  %s6 = inlined_call_operand.vmem [shape: f32[1,512], index: 6, kind: input, shape index: {}]
  %s7 = inlined_call_operand.hbm [shape: f32[64,512], index: 7, kind: output, shape index: {}]
  %s8 = sld [smem:[#allocation0]]
  $region54: #{tpu_custom_call.1} parent=0
    _
  %s10 = ssub.s32 1, %s8
  %s11 = scalar_select 0, %s10, %s8
  $region1: #{tpu_custom_call.1} parent=0
    #allocation5 [shape = 'u8[65536]{0}', space=vmem, size = 0x10000, scoped, tag = 'input window, operand 0, single buffered']
    #allocation6 [shape = 's32[1]{0}', space=sflag, size = 0x4, scoped, tag = 'scoped memory for tpu_custom_call.1']
    #allocation7 [shape = 's32[1]{0}', space=sflag, size = 0x4, scoped, tag = 'scoped memory for tpu_custom_call.1']
    #allocation8 [shape = 'u8[131072]{0}', space=vmem, size = 0x20000, scoped, tag = 'input window, operand 1, single buffered']
    #allocation9 [shape = 's32[1]{0}', space=sflag, size = 0x4, scoped, tag = 'scoped memory for tpu_custom_call.1']
    #allocation10 [shape = 'u8[131072]{0}', space=vmem, size = 0x20000, scoped, tag = 'input window, operand 2, single buffered']
    #allocation11 [shape = 'u8[1048576]{0}', space=vmem, size = 0x100000, scoped, tag = 'input window, operand 3, single buffered']
    #allocation12 [shape = 's32[1]{0}', space=sflag, size = 0x4, scoped, tag = 'scoped memory for tpu_custom_call.1']
    #allocation13 [shape = 'u8[131072]{0}', space=vmem, size = 0x20000, scoped, tag = 'output window, operand 0, single buffered']
    %12 = vsyncpa [#allocation6], 0
    %13 = vsyncpa [#allocation9], 0
    %14 = vsyncpa [#allocation12], 0
    %15 = vsyncpa [#allocation7], 0
    // Predicated region
    $region2: #{tpu_custom_call.1} parent=1 // pred_check
      _
    $region3: #{tpu_custom_call.1} parent=1 // pred_check_branch
      %17 = sbr.rel (0) target = $region5
    $region4: #{tpu_custom_call.1} parent=1 // pred_region
      %s19 = ssub.s32 2048, 2048
      %20 = vsyncadd [#allocation6], %s19
      %s21 = sshll.u32 [#allocation5], 4
      %s22 = int_to_ptr.vmem [resolvable:$true] %s21
      %27 = dma.hbm_to_vmem [thread:$0]  %s0, 2048, %s22, [#allocation6], 512, 512, 32
    $region5: #{tpu_custom_call.1} parent=1 // pred_fallthru
      _
    // Predicated region
    $region6: #{tpu_custom_call.1} parent=1 // pred_check
      _
    $region7: #{tpu_custom_call.1} parent=1 // pred_check_branch
      %29 = sbr.rel (0) target = $region9
    $region8: #{tpu_custom_call.1} parent=1 // pred_region
      %s31 = ssub.s32 4096, 4096
      %32 = vsyncadd [#allocation9], %s31
      %s33 = sshll.u32 [#allocation8], 4
      %s34 = int_to_ptr.vmem [resolvable:$true] %s33
      %39 = dma.hbm_to_vmem [thread:$0]  %s1, 4096, %s34, [#allocation9], 512, 512, 32
    $region9: #{tpu_custom_call.1} parent=1 // pred_fallthru
      _
    // Predicated region
    $region10: #{tpu_custom_call.1} parent=1 // pred_check
      _
    $region11: #{tpu_custom_call.1} parent=1 // pred_check_branch
      %41 = sbr.rel (0) target = $region13
    $region12: #{tpu_custom_call.1} parent=1 // pred_region
      %s43 = ssub.s32 4096, 4096
      %44 = vsyncadd [#allocation9], %s43
      %s45 = sshll.u32 [#allocation10], 4
      %s46 = int_to_ptr.vmem [resolvable:$true] %s45
      %51 = dma.hbm_to_vmem [thread:$0]  %s2, 4096, %s46, [#allocation9], 512, 512, 32
    $region13: #{tpu_custom_call.1} parent=1 // pred_fallthru
      _
    // Predicated region
    $region14: #{tpu_custom_call.1} parent=1 // pred_check
      _
    $region15: #{tpu_custom_call.1} parent=1 // pred_check_branch
      %53 = sbr.rel (0) target = $region17
    $region16: #{tpu_custom_call.1} parent=1 // pred_region
      %s55 = ssub.s32 32768, 32768
      %56 = vsyncadd [#allocation12], %s55
      %s57 = sshll.u32 [#allocation11], 4
      %s58 = int_to_ptr.vmem [resolvable:$true] %s57
      %63 = dma.hbm_to_vmem [thread:$0]  %s3, 32768, %s58, [#allocation12], 512, 512, 32
    $region17: #{tpu_custom_call.1} parent=1 // pred_fallthru
      _
    // Predicated region
    $region18: #{tpu_custom_call.1} parent=1 // pred_check
      _
    $region19: #{tpu_custom_call.1} parent=1 // pred_check_branch
      %65 = sbr.rel (0) target = $region21
    $region20: #{tpu_custom_call.1} parent=1 // pred_region
      _
    $region21: #{tpu_custom_call.1} parent=1 // pred_fallthru
      _
    // Predicated region
    $region22: #{tpu_custom_call.1} parent=1 // pred_check
      _
    $region23: #{tpu_custom_call.1} parent=1 // pred_check_branch
      %67 = sbr.rel (0) target = $region25
    $region24: #{tpu_custom_call.1} parent=1 // pred_region
      _
    $region25: #{tpu_custom_call.1} parent=1 // pred_fallthru
      _
    // Predicated region
    $region26: #{tpu_custom_call.1} parent=1 // pred_check
      _
    $region27: #{tpu_custom_call.1} parent=1 // pred_check_branch
      %69 = sbr.rel (0) target = $region29
    $region28: #{tpu_custom_call.1} parent=1 // pred_region
      %70 = dma.done [#allocation6], 2048
    $region29: #{tpu_custom_call.1} parent=1 // pred_fallthru
      _
    // Predicated region
    $region30: #{tpu_custom_call.1} parent=1 // pred_check
      _
    $region31: #{tpu_custom_call.1} parent=1 // pred_check_branch
      %72 = sbr.rel (0) target = $region33
    $region32: #{tpu_custom_call.1} parent=1 // pred_region
      %73 = dma.done [#allocation9], 4096
    $region33: #{tpu_custom_call.1} parent=1 // pred_fallthru
      _
    // Predicated region
    $region34: #{tpu_custom_call.1} parent=1 // pred_check
      _
    $region35: #{tpu_custom_call.1} parent=1 // pred_check_branch
      %75 = sbr.rel (0) target = $region37
    $region36: #{tpu_custom_call.1} parent=1 // pred_region
      %76 = dma.done [#allocation9], 4096
    $region37: #{tpu_custom_call.1} parent=1 // pred_fallthru
      _
    // Predicated region
    $region38: #{tpu_custom_call.1} parent=1 // pred_check
      _
    $region39: #{tpu_custom_call.1} parent=1 // pred_check_branch
      %78 = sbr.rel (0) target = $region41
    $region40: #{tpu_custom_call.1} parent=1 // pred_region
      %79 = dma.done [#allocation12], 32768
    $region41: #{tpu_custom_call.1} parent=1 // pred_fallthru
      _
    // Predicated region
    $region42: #{tpu_custom_call.1} parent=1 // pred_check
      _
    $region43: #{tpu_custom_call.1} parent=1 // pred_check_branch
      %81 = sbr.rel target = $region45
    $region44: #{tpu_custom_call.1} parent=1 // pred_region
      %82 = sst [smem:[#allocation16]] [#allocation15]
      %83 = sst [smem:[#allocation17]] [#allocation14]
    $region45: #{tpu_custom_call.1} parent=1 // pred_fallthru
      _
    %85 = shalt.err (0)
    %s87 = sshll.u32 [#allocation2], 4
    %s88 = int_to_ptr.vmem [resolvable:$true] %s87
    %90 = dma.hbm_to_vmem [thread:$0]  %s5, 32768, %s88, [#allocation3]
    %v91 = vld [vmem:[#allocation5] sm:$0xff]
    %v92 = vld [vmem:[#allocation5 + $0x8] sm:$0xff]
    %v93 = vld [vmem:[#allocation5 + $0x10] sm:$0xff]
    %v94 = vld [vmem:[#allocation5 + $0x18] sm:$0xff]
    %v95 = vld [vmem:[#allocation5 + $0x20] sm:$0xff]
    %v96 = vld [vmem:[#allocation5 + $0x28] sm:$0xff]
    %v97 = vld [vmem:[#allocation5 + $0x30] sm:$0xff]
    %v98 = vld [vmem:[#allocation5 + $0x38] sm:$0xff]
    %v99 = vld [vmem:[#allocation5 + $0x40] sm:$0xff]
    %v100 = vld [vmem:[#allocation5 + $0x48] sm:$0xff]
    %v101 = vld [vmem:[#allocation5 + $0x50] sm:$0xff]
    %v102 = vld [vmem:[#allocation5 + $0x58] sm:$0xff]
    %v103 = vld [vmem:[#allocation5 + $0x60] sm:$0xff]
    %v104 = vld [vmem:[#allocation5 + $0x68] sm:$0xff]
    %v105 = vld [vmem:[#allocation5 + $0x70] sm:$0xff]
    %v106 = vld [vmem:[#allocation5 + $0x78] sm:$0xff]
    %v107 = vld [vmem:[#allocation11] sm:$0xff]
    %v108 = vld [vmem:[#allocation11 + $0x8] sm:$0xff]
    %v109 = vld [vmem:[#allocation11 + $0x10] sm:$0xff]
    %v110 = vld [vmem:[#allocation11 + $0x18] sm:$0xff]
    %v111 = vld [vmem:[#allocation11 + $0x20] sm:$0xff]
    %v112 = vld [vmem:[#allocation11 + $0x28] sm:$0xff]
    %v113 = vld [vmem:[#allocation11 + $0x30] sm:$0xff]
    %v114 = vld [vmem:[#allocation11 + $0x38] sm:$0xff]
    %v115 = vld [vmem:[#allocation11 + $0x40] sm:$0xff]
    %v116 = vld [vmem:[#allocation11 + $0x48] sm:$0xff]
    %v117 = vld [vmem:[#allocation11 + $0x50] sm:$0xff]
    %v118 = vld [vmem:[#allocation11 + $0x58] sm:$0xff]
    %v119 = vld [vmem:[#allocation11 + $0x60] sm:$0xff]
    %v120 = vld [vmem:[#allocation11 + $0x68] sm:$0xff]
    %v121 = vld [vmem:[#allocation11 + $0x70] sm:$0xff]
    %v122 = vld [vmem:[#allocation11 + $0x78] sm:$0xff]
    %v123 = vld [vmem:[#allocation11 + $0x80] sm:$0xff]
    %v124 = vld [vmem:[#allocation11 + $0x88] sm:$0xff]
    %v125 = vld [vmem:[#allocation11 + $0x90] sm:$0xff]
    %v126 = vld [vmem:[#allocation11 + $0x98] sm:$0xff]
    %v127 = vld [vmem:[#allocation11 + $0xa0] sm:$0xff]
    %v128 = vld [vmem:[#allocation11 + $0xa8] sm:$0xff]
    %v129 = vld [vmem:[#allocation11 + $0xb0] sm:$0xff]
    %v130 = vld [vmem:[#allocation11 + $0xb8] sm:$0xff]
    %v131 = vld [vmem:[#allocation11 + $0xc0] sm:$0xff]
    %v132 = vld [vmem:[#allocation11 + $0xc8] sm:$0xff]
    %v133 = vld [vmem:[#allocation11 + $0xd0] sm:$0xff]
    %v134 = vld [vmem:[#allocation11 + $0xd8] sm:$0xff]
    %v135 = vld [vmem:[#allocation11 + $0xe0] sm:$0xff]
    %v136 = vld [vmem:[#allocation11 + $0xe8] sm:$0xff]
    %v137 = vld [vmem:[#allocation11 + $0xf0] sm:$0xff]
    %v138 = vld [vmem:[#allocation11 + $0xf8] sm:$0xff]
    %v139 = vld [vmem:[#allocation11 + $0x100] sm:$0xff]
    %v140 = vld [vmem:[#allocation11 + $0x108] sm:$0xff]
    %v141 = vld [vmem:[#allocation11 + $0x110] sm:$0xff]
    %v142 = vld [vmem:[#allocation11 + $0x118] sm:$0xff]
    %v143 = vld [vmem:[#allocation11 + $0x120] sm:$0xff]
    %v144 = vld [vmem:[#allocation11 + $0x128] sm:$0xff]
    %v145 = vld [vmem:[#allocation11 + $0x130] sm:$0xff]
    %v146 = vld [vmem:[#allocation11 + $0x138] sm:$0xff]
    %v147 = vld [vmem:[#allocation11 + $0x140] sm:$0xff]
    %v148 = vld [vmem:[#allocation11 + $0x148] sm:$0xff]
    %v149 = vld [vmem:[#allocation11 + $0x150] sm:$0xff]
    %v150 = vld [vmem:[#allocation11 + $0x158] sm:$0xff]
    %v151 = vld [vmem:[#allocation11 + $0x160] sm:$0xff]
    %v152 = vld [vmem:[#allocation11 + $0x168] sm:$0xff]
    %v153 = vld [vmem:[#allocation11 + $0x170] sm:$0xff]
    %v154 = vld [vmem:[#allocation11 + $0x178] sm:$0xff]
    %v155 = vld [vmem:[#allocation11 + $0x180] sm:$0xff]
    %v156 = vld [vmem:[#allocation11 + $0x188] sm:$0xff]
    %v157 = vld [vmem:[#allocation11 + $0x190] sm:$0xff]
    %v158 = vld [vmem:[#allocation11 + $0x198] sm:$0xff]
    %v159 = vld [vmem:[#allocation11 + $0x1a0] sm:$0xff]
    %v160 = vld [vmem:[#allocation11 + $0x1a8] sm:$0xff]
    %v161 = vld [vmem:[#allocation11 + $0x1b0] sm:$0xff]
    %v162 = vld [vmem:[#allocation11 + $0x1b8] sm:$0xff]
    %v163 = vld [vmem:[#allocation11 + $0x1c0] sm:$0xff]
    %v164 = vld [vmem:[#allocation11 + $0x1c8] sm:$0xff]
    %v165 = vld [vmem:[#allocation11 + $0x1d0] sm:$0xff]
    %v166 = vld [vmem:[#allocation11 + $0x1d8] sm:$0xff]
    %v167 = vld [vmem:[#allocation11 + $0x1e0] sm:$0xff]
    %v168 = vld [vmem:[#allocation11 + $0x1e8] sm:$0xff]
    %v169 = vld [vmem:[#allocation11 + $0x1f0] sm:$0xff]
    %v170 = vld [vmem:[#allocation11 + $0x1f8] sm:$0xff]
    %v171 = vld [vmem:[#allocation11 + $0x200] sm:$0xff]
    %v172 = vld [vmem:[#allocation11 + $0x208] sm:$0xff]
    %v173 = vld [vmem:[#allocation11 + $0x210] sm:$0xff]
    %v174 = vld [vmem:[#allocation11 + $0x218] sm:$0xff]
    %v175 = vld [vmem:[#allocation11 + $0x220] sm:$0xff]
    %v176 = vld [vmem:[#allocation11 + $0x228] sm:$0xff]
    %v177 = vld [vmem:[#allocation11 + $0x230] sm:$0xff]
    %v178 = vld [vmem:[#allocation11 + $0x238] sm:$0xff]
    %v179 = vld [vmem:[#allocation11 + $0x240] sm:$0xff]
    %v180 = vld [vmem:[#allocation11 + $0x248] sm:$0xff]
    %v181 = vld [vmem:[#allocation11 + $0x250] sm:$0xff]
    %v182 = vld [vmem:[#allocation11 + $0x258] sm:$0xff]
    %v183 = vld [vmem:[#allocation11 + $0x260] sm:$0xff]
    %v184 = vld [vmem:[#allocation11 + $0x268] sm:$0xff]
    %v185 = vld [vmem:[#allocation11 + $0x270] sm:$0xff]
    %v186 = vld [vmem:[#allocation11 + $0x278] sm:$0xff]
    %v187 = vld [vmem:[#allocation11 + $0x280] sm:$0xff]
    %v188 = vld [vmem:[#allocation11 + $0x288] sm:$0xff]
    %v189 = vld [vmem:[#allocation11 + $0x290] sm:$0xff]
    %v190 = vld [vmem:[#allocation11 + $0x298] sm:$0xff]
    %v191 = vld [vmem:[#allocation11 + $0x2a0] sm:$0xff]
    %v192 = vld [vmem:[#allocation11 + $0x2a8] sm:$0xff]
    %v193 = vld [vmem:[#allocation11 + $0x2b0] sm:$0xff]
    %v194 = vld [vmem:[#allocation11 + $0x2b8] sm:$0xff]
    %v195 = vld [vmem:[#allocation11 + $0x2c0] sm:$0xff]
    %v196 = vld [vmem:[#allocation11 + $0x2c8] sm:$0xff]
    %v197 = vld [vmem:[#allocation11 + $0x2d0] sm:$0xff]
    %v198 = vld [vmem:[#allocation11 + $0x2d8] sm:$0xff]
    %v199 = vld [vmem:[#allocation11 + $0x2e0] sm:$0xff]
    %v200 = vld [vmem:[#allocation11 + $0x2e8] sm:$0xff]
    %v201 = vld [vmem:[#allocation11 + $0x2f0] sm:$0xff]
    %v202 = vld [vmem:[#allocation11 + $0x2f8] sm:$0xff]
    %v203 = vld [vmem:[#allocation11 + $0x300] sm:$0xff]
    %v204 = vld [vmem:[#allocation11 + $0x308] sm:$0xff]
    %v205 = vld [vmem:[#allocation11 + $0x310] sm:$0xff]
    %v206 = vld [vmem:[#allocation11 + $0x318] sm:$0xff]
    %v207 = vld [vmem:[#allocation11 + $0x320] sm:$0xff]
    %v208 = vld [vmem:[#allocation11 + $0x328] sm:$0xff]
    %v209 = vld [vmem:[#allocation11 + $0x330] sm:$0xff]
    %v210 = vld [vmem:[#allocation11 + $0x338] sm:$0xff]
    %v211 = vld [vmem:[#allocation11 + $0x340] sm:$0xff]
    %v212 = vld [vmem:[#allocation11 + $0x348] sm:$0xff]
    %v213 = vld [vmem:[#allocation11 + $0x350] sm:$0xff]
    %v214 = vld [vmem:[#allocation11 + $0x358] sm:$0xff]
    %v215 = vld [vmem:[#allocation11 + $0x360] sm:$0xff]
    %v216 = vld [vmem:[#allocation11 + $0x368] sm:$0xff]
    %v217 = vld [vmem:[#allocation11 + $0x370] sm:$0xff]
    %v218 = vld [vmem:[#allocation11 + $0x378] sm:$0xff]
    %v219 = vld [vmem:[#allocation11 + $0x380] sm:$0xff]
    %v220 = vld [vmem:[#allocation11 + $0x388] sm:$0xff]
    %v221 = vld [vmem:[#allocation11 + $0x390] sm:$0xff]
    %v222 = vld [vmem:[#allocation11 + $0x398] sm:$0xff]
    %v223 = vld [vmem:[#allocation11 + $0x3a0] sm:$0xff]
    %v224 = vld [vmem:[#allocation11 + $0x3a8] sm:$0xff]
    %v225 = vld [vmem:[#allocation11 + $0x3b0] sm:$0xff]
    %v226 = vld [vmem:[#allocation11 + $0x3b8] sm:$0xff]
    %v227 = vld [vmem:[#allocation11 + $0x3c0] sm:$0xff]
    %v228 = vld [vmem:[#allocation11 + $0x3c8] sm:$0xff]
    %v229 = vld [vmem:[#allocation11 + $0x3d0] sm:$0xff]
    %v230 = vld [vmem:[#allocation11 + $0x3d8] sm:$0xff]
    %v231 = vld [vmem:[#allocation11 + $0x3e0] sm:$0xff]
    %v232 = vld [vmem:[#allocation11 + $0x3e8] sm:$0xff]
    %v233 = vld [vmem:[#allocation11 + $0x3f0] sm:$0xff]
    %v234 = vld [vmem:[#allocation11 + $0x3f8] sm:$0xff]
    %v235 = vld [vmem:[#allocation11 + $0x400] sm:$0xff]
    %v236 = vld [vmem:[#allocation11 + $0x408] sm:$0xff]
    %v237 = vld [vmem:[#allocation11 + $0x410] sm:$0xff]
    %v238 = vld [vmem:[#allocation11 + $0x418] sm:$0xff]
    %v239 = vld [vmem:[#allocation11 + $0x420] sm:$0xff]
    %v240 = vld [vmem:[#allocation11 + $0x428] sm:$0xff]
    %v241 = vld [vmem:[#allocation11 + $0x430] sm:$0xff]
    %v242 = vld [vmem:[#allocation11 + $0x438] sm:$0xff]
    %v243 = vld [vmem:[#allocation11 + $0x440] sm:$0xff]
    %v244 = vld [vmem:[#allocation11 + $0x448] sm:$0xff]
    %v245 = vld [vmem:[#allocation11 + $0x450] sm:$0xff]
    %v246 = vld [vmem:[#allocation11 + $0x458] sm:$0xff]
    %v247 = vld [vmem:[#allocation11 + $0x460] sm:$0xff]
    %v248 = vld [vmem:[#allocation11 + $0x468] sm:$0xff]
    %v249 = vld [vmem:[#allocation11 + $0x470] sm:$0xff]
    %v250 = vld [vmem:[#allocation11 + $0x478] sm:$0xff]
    %v251 = vld [vmem:[#allocation11 + $0x480] sm:$0xff]
    %v252 = vld [vmem:[#allocation11 + $0x488] sm:$0xff]
    %v253 = vld [vmem:[#allocation11 + $0x490] sm:$0xff]
    %v254 = vld [vmem:[#allocation11 + $0x498] sm:$0xff]
    %v255 = vld [vmem:[#allocation11 + $0x4a0] sm:$0xff]
    %v256 = vld [vmem:[#allocation11 + $0x4a8] sm:$0xff]
    %v257 = vld [vmem:[#allocation11 + $0x4b0] sm:$0xff]
    %v258 = vld [vmem:[#allocation11 + $0x4b8] sm:$0xff]
    %v259 = vld [vmem:[#allocation11 + $0x4c0] sm:$0xff]
    %v260 = vld [vmem:[#allocation11 + $0x4c8] sm:$0xff]
    %v261 = vld [vmem:[#allocation11 + $0x4d0] sm:$0xff]
    %v262 = vld [vmem:[#allocation11 + $0x4d8] sm:$0xff]
    %v263 = vld [vmem:[#allocation11 + $0x4e0] sm:$0xff]
    %v264 = vld [vmem:[#allocation11 + $0x4e8] sm:$0xff]
    %v265 = vld [vmem:[#allocation11 + $0x4f0] sm:$0xff]
    %v266 = vld [vmem:[#allocation11 + $0x4f8] sm:$0xff]
    %v267 = vld [vmem:[#allocation11 + $0x500] sm:$0xff]
    %v268 = vld [vmem:[#allocation11 + $0x508] sm:$0xff]
    %v269 = vld [vmem:[#allocation11 + $0x510] sm:$0xff]
    %v270 = vld [vmem:[#allocation11 + $0x518] sm:$0xff]
    %v271 = vld [vmem:[#allocation11 + $0x520] sm:$0xff]
    %v272 = vld [vmem:[#allocation11 + $0x528] sm:$0xff]
    %v273 = vld [vmem:[#allocation11 + $0x530] sm:$0xff]
    %v274 = vld [vmem:[#allocation11 + $0x538] sm:$0xff]
    %v275 = vld [vmem:[#allocation11 + $0x540] sm:$0xff]
    %v276 = vld [vmem:[#allocation11 + $0x548] sm:$0xff]
    %v277 = vld [vmem:[#allocation11 + $0x550] sm:$0xff]
    %v278 = vld [vmem:[#allocation11 + $0x558] sm:$0xff]
    %v279 = vld [vmem:[#allocation11 + $0x560] sm:$0xff]
    %v280 = vld [vmem:[#allocation11 + $0x568] sm:$0xff]
    %v281 = vld [vmem:[#allocation11 + $0x570] sm:$0xff]
    %v282 = vld [vmem:[#allocation11 + $0x578] sm:$0xff]
    %v283 = vld [vmem:[#allocation11 + $0x580] sm:$0xff]
    %v284 = vld [vmem:[#allocation11 + $0x588] sm:$0xff]
    %v285 = vld [vmem:[#allocation11 + $0x590] sm:$0xff]
    %v286 = vld [vmem:[#allocation11 + $0x598] sm:$0xff]
    %v287 = vld [vmem:[#allocation11 + $0x5a0] sm:$0xff]
    %v288 = vld [vmem:[#allocation11 + $0x5a8] sm:$0xff]
    %v289 = vld [vmem:[#allocation11 + $0x5b0] sm:$0xff]
    %v290 = vld [vmem:[#allocation11 + $0x5b8] sm:$0xff]
    %v291 = vld [vmem:[#allocation11 + $0x5c0] sm:$0xff]
    %v292 = vld [vmem:[#allocation11 + $0x5c8] sm:$0xff]
    %v293 = vld [vmem:[#allocation11 + $0x5d0] sm:$0xff]
    %v294 = vld [vmem:[#allocation11 + $0x5d8] sm:$0xff]
    %v295 = vld [vmem:[#allocation11 + $0x5e0] sm:$0xff]
    %v296 = vld [vmem:[#allocation11 + $0x5e8] sm:$0xff]
    %v297 = vld [vmem:[#allocation11 + $0x5f0] sm:$0xff]
    %v298 = vld [vmem:[#allocation11 + $0x5f8] sm:$0xff]
    %v299 = vld [vmem:[#allocation11 + $0x600] sm:$0xff]
    %v300 = vld [vmem:[#allocation11 + $0x608] sm:$0xff]
    %v301 = vld [vmem:[#allocation11 + $0x610] sm:$0xff]
    %v302 = vld [vmem:[#allocation11 + $0x618] sm:$0xff]
    %v303 = vld [vmem:[#allocation11 + $0x620] sm:$0xff]
    %v304 = vld [vmem:[#allocation11 + $0x628] sm:$0xff]
    %v305 = vld [vmem:[#allocation11 + $0x630] sm:$0xff]
    %v306 = vld [vmem:[#allocation11 + $0x638] sm:$0xff]
    %v307 = vld [vmem:[#allocation11 + $0x640] sm:$0xff]
    %v308 = vld [vmem:[#allocation11 + $0x648] sm:$0xff]
    %v309 = vld [vmem:[#allocation11 + $0x650] sm:$0xff]
    %v310 = vld [vmem:[#allocation11 + $0x658] sm:$0xff]
    %v311 = vld [vmem:[#allocation11 + $0x660] sm:$0xff]
    %v312 = vld [vmem:[#allocation11 + $0x668] sm:$0xff]
    %v313 = vld [vmem:[#allocation11 + $0x670] sm:$0xff]
    %v314 = vld [vmem:[#allocation11 + $0x678] sm:$0xff]
    %v315 = vld [vmem:[#allocation11 + $0x680] sm:$0xff]
    %v316 = vld [vmem:[#allocation11 + $0x688] sm:$0xff]
    %v317 = vld [vmem:[#allocation11 + $0x690] sm:$0xff]
    %v318 = vld [vmem:[#allocation11 + $0x698] sm:$0xff]
    %v319 = vld [vmem:[#allocation11 + $0x6a0] sm:$0xff]
    %v320 = vld [vmem:[#allocation11 + $0x6a8] sm:$0xff]
    %v321 = vld [vmem:[#allocation11 + $0x6b0] sm:$0xff]
    %v322 = vld [vmem:[#allocation11 + $0x6b8] sm:$0xff]
    %v323 = vld [vmem:[#allocation11 + $0x6c0] sm:$0xff]
    %v324 = vld [vmem:[#allocation11 + $0x6c8] sm:$0xff]
    %v325 = vld [vmem:[#allocation11 + $0x6d0] sm:$0xff]
    %v326 = vld [vmem:[#allocation11 + $0x6d8] sm:$0xff]
    %v327 = vld [vmem:[#allocation11 + $0x6e0] sm:$0xff]
    %v328 = vld [vmem:[#allocation11 + $0x6e8] sm:$0xff]
    %v329 = vld [vmem:[#allocation11 + $0x6f0] sm:$0xff]
    %v330 = vld [vmem:[#allocation11 + $0x6f8] sm:$0xff]
    %v331 = vld [vmem:[#allocation11 + $0x700] sm:$0xff]
    %v332 = vld [vmem:[#allocation11 + $0x708] sm:$0xff]
    %v333 = vld [vmem:[#allocation11 + $0x710] sm:$0xff]
    %v334 = vld [vmem:[#allocation11 + $0x718] sm:$0xff]
    %v335 = vld [vmem:[#allocation11 + $0x720] sm:$0xff]
    %v336 = vld [vmem:[#allocation11 + $0x728] sm:$0xff]
    %v337 = vld [vmem:[#allocation11 + $0x730] sm:$0xff]
    %v338 = vld [vmem:[#allocation11 + $0x738] sm:$0xff]
    %v339 = vld [vmem:[#allocation11 + $0x740] sm:$0xff]
    %v340 = vld [vmem:[#allocation11 + $0x748] sm:$0xff]
    %v341 = vld [vmem:[#allocation11 + $0x750] sm:$0xff]
    %v342 = vld [vmem:[#allocation11 + $0x758] sm:$0xff]
    %v343 = vld [vmem:[#allocation11 + $0x760] sm:$0xff]
    %v344 = vld [vmem:[#allocation11 + $0x768] sm:$0xff]
    %v345 = vld [vmem:[#allocation11 + $0x770] sm:$0xff]
    %v346 = vld [vmem:[#allocation11 + $0x778] sm:$0xff]
    %v347 = vld [vmem:[#allocation11 + $0x780] sm:$0xff]
    %v348 = vld [vmem:[#allocation11 + $0x788] sm:$0xff]
    %v349 = vld [vmem:[#allocation11 + $0x790] sm:$0xff]
    %v350 = vld [vmem:[#allocation11 + $0x798] sm:$0xff]
    %v351 = vld [vmem:[#allocation11 + $0x7a0] sm:$0xff]
    %v352 = vld [vmem:[#allocation11 + $0x7a8] sm:$0xff]
    %v353 = vld [vmem:[#allocation11 + $0x7b0] sm:$0xff]
    %v354 = vld [vmem:[#allocation11 + $0x7b8] sm:$0xff]
    %v355 = vld [vmem:[#allocation11 + $0x7c0] sm:$0xff]
    %v356 = vld [vmem:[#allocation11 + $0x7c8] sm:$0xff]
    %v357 = vld [vmem:[#allocation11 + $0x7d0] sm:$0xff]
    %v358 = vld [vmem:[#allocation11 + $0x7d8] sm:$0xff]
    %v359 = vld [vmem:[#allocation11 + $0x7e0] sm:$0xff]
    %v360 = vld [vmem:[#allocation11 + $0x7e8] sm:$0xff]
    %v361 = vld [vmem:[#allocation11 + $0x7f0] sm:$0xff]
    %v362 = vld [vmem:[#allocation11 + $0x7f8] sm:$0xff]
    %v363 = vld [vmem:[%s4] sm:$0xf]
    %v365 = vlaneseq
    %v366 = vshrl.u32 %v365, 7
    %v367 = vsub.s32 0, %v366
    %v368 = vrot.slane %v363, %v367
    %v369 = vlaneseq
    %v370 = vshrl.u32 %v369, 7
    %v371 = vsub.s32 1, %v370
    %v372 = vrot.slane %v363, %v371
    %v373 = vlaneseq
    %v374 = vshrl.u32 %v373, 7
    %v375 = vsub.s32 2, %v374
    %v376 = vrot.slane %v363, %v375
    %v377 = vlaneseq
    %v378 = vshrl.u32 %v377, 7
    %v379 = vsub.s32 3, %v378
    %v380 = vrot.slane %v363, %v379
    %385 = vmatprep.subr.mxu0 %v108
    %386 = vmatpush1.msra.mxu0 %v107
    %387 = vmatprep.subr.mxu0 %v112
    %388 = vmatpush1.msra.mxu0 %v111
    %389 = vmatprep.subr.mxu0 %v116
    %390 = vmatpush1.msra.mxu0 %v115
    %391 = vmatprep.subr.mxu0 %v120
    %392 = vmatpush1.msra.mxu0 %v119
    %393 = vmatprep.subr.mxu0 %v124
    %394 = vmatpush1.msra.mxu0 %v123
    %395 = vmatprep.subr.mxu0 %v128
    %396 = vmatpush1.msra.mxu0 %v127
    %397 = vmatprep.subr.mxu0 %v132
    %398 = vmatpush1.msra.mxu0 %v131
    %399 = vmatprep.subr.mxu0 %v136
    %400 = vmatpush1.msra.mxu0 %v135
    %401 = vmatprep.subr.mxu0 %v140
    %402 = vmatpush1.msra.mxu0 %v139
    %403 = vmatprep.subr.mxu0 %v144
    %404 = vmatpush1.msra.mxu0 %v143
    %405 = vmatprep.subr.mxu0 %v148
    %406 = vmatpush1.msra.mxu0 %v147
    %407 = vmatprep.subr.mxu0 %v152
    %408 = vmatpush1.msra.mxu0 %v151
    %409 = vmatprep.subr.mxu0 %v156
    %410 = vmatpush1.msra.mxu0 %v155
    %411 = vmatprep.subr.mxu0 %v160
    %412 = vmatpush1.msra.mxu0 %v159
    %413 = vmatprep.subr.mxu0 %v164
    %414 = vmatpush1.msra.mxu0 %v163
    %415 = vmatprep.subr.mxu0 %v168
    %416 = vmatpush1.msra.mxu0 %v167
    %417 = vmatprep.subr.mxu0 %v172
    %418 = vmatpush1.msra.mxu0 %v171
    %419 = vmatprep.subr.mxu0 %v176
    %420 = vmatpush1.msra.mxu0 %v175
    %421 = vmatprep.subr.mxu0 %v180
    %422 = vmatpush1.msra.mxu0 %v179
    %423 = vmatprep.subr.mxu0 %v184
    %424 = vmatpush1.msra.mxu0 %v183
    %425 = vmatprep.subr.mxu0 %v188
    %426 = vmatpush1.msra.mxu0 %v187
    %427 = vmatprep.subr.mxu0 %v192
    %428 = vmatpush1.msra.mxu0 %v191
    %429 = vmatprep.subr.mxu0 %v196
    %430 = vmatpush1.msra.mxu0 %v195
    %431 = vmatprep.subr.mxu0 %v200
    %432 = vmatpush1.msra.mxu0 %v199
    %433 = vmatprep.subr.mxu0 %v204
    %434 = vmatpush1.msra.mxu0 %v203
    %435 = vmatprep.subr.mxu0 %v208
    %436 = vmatpush1.msra.mxu0 %v207
    %437 = vmatprep.subr.mxu0 %v212
    %438 = vmatpush1.msra.mxu0 %v211
    %439 = vmatprep.subr.mxu0 %v216
    %440 = vmatpush1.msra.mxu0 %v215
    %441 = vmatprep.subr.mxu0 %v220
    %442 = vmatpush1.msra.mxu0 %v219
    %443 = vmatprep.subr.mxu0 %v224
    %444 = vmatpush1.msra.mxu0 %v223
    %445 = vmatprep.subr.mxu0 %v228
    %446 = vmatpush1.msra.mxu0 %v227
    %447 = vmatprep.subr.mxu0 %v232
    %448 = vmatpush1.msra.mxu0 %v231
    %449 = vmatprep.mubr.f32.mxu0 %v92
    %450 = vmatmul.mubr.f32.gmra.mrb[0].mxu0 %v91
    %v451 = vpop.f32.mrb[0].mxu0
    %v452 = vadd.f32 %v368, %v451
    %v453 = vpop.f32.mrb[0].mxu0
    %v454 = vadd.f32 %v372, %v453
    %455 = vmatprep.mubr.f32.mxu0 %v96
    %456 = vmatmul.mubr.f32.gmra.mrb[0].mxu0 %v95
    %v457 = vpop.f32.mrb[0].mxu0
    %v458 = vadd.f32 %v368, %v457
    %v459 = vpop.f32.mrb[0].mxu0
    %v460 = vadd.f32 %v372, %v459
    %461 = vmatprep.mubr.f32.mxu0 %v100
    %462 = vmatmul.mubr.f32.gmra.mrb[0].mxu0 %v99
    %v463 = vpop.f32.mrb[0].mxu0
    %v464 = vadd.f32 %v368, %v463
    %v465 = vpop.f32.mrb[0].mxu0
    %v466 = vadd.f32 %v372, %v465
    %467 = vmatprep.mubr.f32.mxu0 %v104
    %468 = vmatmul.mubr.f32.gmra.mrb[0].mxu0 %v103
    %v469 = vpop.f32.mrb[0].mxu0
    %v470 = vadd.f32 %v368, %v469
    %v471 = vpop.f32.mrb[0].mxu0
    %v472 = vadd.f32 %v372, %v471
    %473 = vdwg.mxu0
    %474 = vmatprep.subr.mxu0 %v236
    %475 = vmatpush1.msra.mxu0 %v235
    %476 = vmatprep.subr.mxu0 %v240
    %477 = vmatpush1.msra.mxu0 %v239
    %478 = vmatprep.subr.mxu0 %v244
    %479 = vmatpush1.msra.mxu0 %v243
    %480 = vmatprep.subr.mxu0 %v248
    %481 = vmatpush1.msra.mxu0 %v247
    %482 = vmatprep.subr.mxu0 %v252
    %483 = vmatpush1.msra.mxu0 %v251
    %484 = vmatprep.subr.mxu0 %v256
    %485 = vmatpush1.msra.mxu0 %v255
    %486 = vmatprep.subr.mxu0 %v260
    %487 = vmatpush1.msra.mxu0 %v259
    %488 = vmatprep.subr.mxu0 %v264
    %489 = vmatpush1.msra.mxu0 %v263
    %490 = vmatprep.subr.mxu0 %v268
    %491 = vmatpush1.msra.mxu0 %v267
    %492 = vmatprep.subr.mxu0 %v272
    %493 = vmatpush1.msra.mxu0 %v271
    %494 = vmatprep.subr.mxu0 %v276
    %495 = vmatpush1.msra.mxu0 %v275
    %496 = vmatprep.subr.mxu0 %v280
    %497 = vmatpush1.msra.mxu0 %v279
    %498 = vmatprep.subr.mxu0 %v284
    %499 = vmatpush1.msra.mxu0 %v283
    %500 = vmatprep.subr.mxu0 %v288
    %501 = vmatpush1.msra.mxu0 %v287
    %502 = vmatprep.subr.mxu0 %v292
    %503 = vmatpush1.msra.mxu0 %v291
    %504 = vmatprep.subr.mxu0 %v296
    %505 = vmatpush1.msra.mxu0 %v295
    %506 = vmatprep.subr.mxu0 %v300
    %507 = vmatpush1.msra.mxu0 %v299
    %508 = vmatprep.subr.mxu0 %v304
    %509 = vmatpush1.msra.mxu0 %v303
    %510 = vmatprep.subr.mxu0 %v308
    %511 = vmatpush1.msra.mxu0 %v307
    %512 = vmatprep.subr.mxu0 %v312
    %513 = vmatpush1.msra.mxu0 %v311
    %514 = vmatprep.subr.mxu0 %v316
    %515 = vmatpush1.msra.mxu0 %v315
    %516 = vmatprep.subr.mxu0 %v320
    %517 = vmatpush1.msra.mxu0 %v319
    %518 = vmatprep.subr.mxu0 %v324
    %519 = vmatpush1.msra.mxu0 %v323
    %520 = vmatprep.subr.mxu0 %v328
    %521 = vmatpush1.msra.mxu0 %v327
    %522 = vmatprep.subr.mxu0 %v332
    %523 = vmatpush1.msra.mxu0 %v331
    %524 = vmatprep.subr.mxu0 %v336
    %525 = vmatpush1.msra.mxu0 %v335
    %526 = vmatprep.subr.mxu0 %v340
    %527 = vmatpush1.msra.mxu0 %v339
    %528 = vmatprep.subr.mxu0 %v344
    %529 = vmatpush1.msra.mxu0 %v343
    %530 = vmatprep.subr.mxu0 %v348
    %531 = vmatpush1.msra.mxu0 %v347
    %532 = vmatprep.subr.mxu0 %v352
    %533 = vmatpush1.msra.mxu0 %v351
    %534 = vmatprep.subr.mxu0 %v356
    %535 = vmatpush1.msra.mxu0 %v355
    %536 = vmatprep.subr.mxu0 %v360
    %537 = vmatpush1.msra.mxu0 %v359
    %538 = vmatprep.mubr.f32.mxu0 %v94
    %539 = vmatmul.mubr.f32.gmra.mrb[0].mxu0 %v93
    %v540 = vpop.f32.mrb[0].mxu0
    %v541 = vadd.f32 %v452, %v540
    %v542 = vpop.f32.mrb[0].mxu0
    %v543 = vadd.f32 %v454, %v542
    %544 = vmatprep.mubr.f32.mxu0 %v98
    %545 = vmatmul.mubr.f32.gmra.mrb[0].mxu0 %v97
    %v546 = vpop.f32.mrb[0].mxu0
    %v547 = vadd.f32 %v458, %v546
    %v548 = vpop.f32.mrb[0].mxu0
    %v549 = vadd.f32 %v460, %v548
    %550 = vmatprep.mubr.f32.mxu0 %v102
    %551 = vmatmul.mubr.f32.gmra.mrb[0].mxu0 %v101
    %v552 = vpop.f32.mrb[0].mxu0
    %v553 = vadd.f32 %v464, %v552
    %v554 = vpop.f32.mrb[0].mxu0
    %v555 = vadd.f32 %v466, %v554
    %556 = vmatprep.mubr.f32.mxu0 %v106
    %557 = vmatmul.mubr.f32.gmra.mrb[0].mxu0 %v105
    %v558 = vpop.f32.mrb[0].mxu0
    %v559 = vadd.f32 %v470, %v558
    %v560 = vpop.f32.mrb[0].mxu0
    %v561 = vadd.f32 %v472, %v560
    %562 = vdwg.mxu0
    %563 = vmatprep.subr.mxu0 %v110
    %564 = vmatpush1.msra.mxu0 %v109
    %565 = vmatprep.subr.mxu0 %v114
    %566 = vmatpush1.msra.mxu0 %v113
    %567 = vmatprep.subr.mxu0 %v118
    %568 = vmatpush1.msra.mxu0 %v117
    %569 = vmatprep.subr.mxu0 %v122
    %570 = vmatpush1.msra.mxu0 %v121
    %571 = vmatprep.subr.mxu0 %v126
    %572 = vmatpush1.msra.mxu0 %v125
    %573 = vmatprep.subr.mxu0 %v130
    %574 = vmatpush1.msra.mxu0 %v129
    %575 = vmatprep.subr.mxu0 %v134
    %576 = vmatpush1.msra.mxu0 %v133
    %577 = vmatprep.subr.mxu0 %v138
    %578 = vmatpush1.msra.mxu0 %v137
    %579 = vmatprep.subr.mxu0 %v142
    %580 = vmatpush1.msra.mxu0 %v141
    %581 = vmatprep.subr.mxu0 %v146
    %582 = vmatpush1.msra.mxu0 %v145
    %583 = vmatprep.subr.mxu0 %v150
    %584 = vmatpush1.msra.mxu0 %v149
    %585 = vmatprep.subr.mxu0 %v154
    %586 = vmatpush1.msra.mxu0 %v153
    %587 = vmatprep.subr.mxu0 %v158
    %588 = vmatpush1.msra.mxu0 %v157
    %589 = vmatprep.subr.mxu0 %v162
    %590 = vmatpush1.msra.mxu0 %v161
    %591 = vmatprep.subr.mxu0 %v166
    %592 = vmatpush1.msra.mxu0 %v165
    %593 = vmatprep.subr.mxu0 %v170
    %594 = vmatpush1.msra.mxu0 %v169
    %595 = vmatprep.subr.mxu0 %v174
    %596 = vmatpush1.msra.mxu0 %v173
    %597 = vmatprep.subr.mxu0 %v178
    %598 = vmatpush1.msra.mxu0 %v177
    %599 = vmatprep.subr.mxu0 %v182
    %600 = vmatpush1.msra.mxu0 %v181
    %601 = vmatprep.subr.mxu0 %v186
    %602 = vmatpush1.msra.mxu0 %v185
    %603 = vmatprep.subr.mxu0 %v190
    %604 = vmatpush1.msra.mxu0 %v189
    %605 = vmatprep.subr.mxu0 %v194
    %606 = vmatpush1.msra.mxu0 %v193
    %607 = vmatprep.subr.mxu0 %v198
    %608 = vmatpush1.msra.mxu0 %v197
    %609 = vmatprep.subr.mxu0 %v202
    %610 = vmatpush1.msra.mxu0 %v201
    %611 = vmatprep.subr.mxu0 %v206
    %612 = vmatpush1.msra.mxu0 %v205
    %613 = vmatprep.subr.mxu0 %v210
    %614 = vmatpush1.msra.mxu0 %v209
    %615 = vmatprep.subr.mxu0 %v214
    %616 = vmatpush1.msra.mxu0 %v213
    %617 = vmatprep.subr.mxu0 %v218
    %618 = vmatpush1.msra.mxu0 %v217
    %619 = vmatprep.subr.mxu0 %v222
    %620 = vmatpush1.msra.mxu0 %v221
    %621 = vmatprep.subr.mxu0 %v226
    %622 = vmatpush1.msra.mxu0 %v225
    %623 = vmatprep.subr.mxu0 %v230
    %624 = vmatpush1.msra.mxu0 %v229
    %625 = vmatprep.subr.mxu0 %v234
    %626 = vmatpush1.msra.mxu0 %v233
    %627 = vmatprep.mubr.f32.mxu0 %v92
    %628 = vmatmul.mubr.f32.gmra.mrb[0].mxu0 %v91
    %v629 = vpop.f32.mrb[0].mxu0
    %v630 = vadd.f32 %v376, %v629
    %v631 = vpop.f32.mrb[0].mxu0
    %v632 = vadd.f32 %v380, %v631
    %633 = vmatprep.mubr.f32.mxu0 %v96
    %634 = vmatmul.mubr.f32.gmra.mrb[0].mxu0 %v95
    %v635 = vpop.f32.mrb[0].mxu0
    %v636 = vadd.f32 %v376, %v635
    %v637 = vpop.f32.mrb[0].mxu0
    %v638 = vadd.f32 %v380, %v637
    %639 = vmatprep.mubr.f32.mxu0 %v100
    %640 = vmatmul.mubr.f32.gmra.mrb[0].mxu0 %v99
    %v641 = vpop.f32.mrb[0].mxu0
    %v642 = vadd.f32 %v376, %v641
    %v643 = vpop.f32.mrb[0].mxu0
    %v644 = vadd.f32 %v380, %v643
    %645 = vmatprep.mubr.f32.mxu0 %v104
    %646 = vmatmul.mubr.f32.gmra.mrb[0].mxu0 %v103
    %v647 = vpop.f32.mrb[0].mxu0
    %v648 = vadd.f32 %v376, %v647
    %v649 = vpop.f32.mrb[0].mxu0
    %v650 = vadd.f32 %v380, %v649
    %651 = vdwg.mxu0
    %652 = vmatprep.subr.mxu0 %v238
    %653 = vmatpush1.msra.mxu0 %v237
    %654 = vmatprep.subr.mxu0 %v242
    %655 = vmatpush1.msra.mxu0 %v241
    %656 = vmatprep.subr.mxu0 %v246
    %657 = vmatpush1.msra.mxu0 %v245
    %658 = vmatprep.subr.mxu0 %v250
    %659 = vmatpush1.msra.mxu0 %v249
    %660 = vmatprep.subr.mxu0 %v254
    %661 = vmatpush1.msra.mxu0 %v253
    %662 = vmatprep.subr.mxu0 %v258
    %663 = vmatpush1.msra.mxu0 %v257
    %664 = vmatprep.subr.mxu0 %v262
    %665 = vmatpush1.msra.mxu0 %v261
    %666 = vmatprep.subr.mxu0 %v266
    %667 = vmatpush1.msra.mxu0 %v265
    %668 = vmatprep.subr.mxu0 %v270
    %669 = vmatpush1.msra.mxu0 %v269
    %670 = vmatprep.subr.mxu0 %v274
    %671 = vmatpush1.msra.mxu0 %v273
    %672 = vmatprep.subr.mxu0 %v278
    %673 = vmatpush1.msra.mxu0 %v277
    %674 = vmatprep.subr.mxu0 %v282
    %675 = vmatpush1.msra.mxu0 %v281
    %676 = vmatprep.subr.mxu0 %v286
    %677 = vmatpush1.msra.mxu0 %v285
    %678 = vmatprep.subr.mxu0 %v290
    %679 = vmatpush1.msra.mxu0 %v289
    %680 = vmatprep.subr.mxu0 %v294
    %681 = vmatpush1.msra.mxu0 %v293
    %682 = vmatprep.subr.mxu0 %v298
    %683 = vmatpush1.msra.mxu0 %v297
    %684 = vmatprep.subr.mxu0 %v302
    %685 = vmatpush1.msra.mxu0 %v301
    %686 = vmatprep.subr.mxu0 %v306
    %687 = vmatpush1.msra.mxu0 %v305
    %688 = vmatprep.subr.mxu0 %v310
    %689 = vmatpush1.msra.mxu0 %v309
    %690 = vmatprep.subr.mxu0 %v314
    %691 = vmatpush1.msra.mxu0 %v313
    %692 = vmatprep.subr.mxu0 %v318
    %693 = vmatpush1.msra.mxu0 %v317
    %694 = vmatprep.subr.mxu0 %v322
    %695 = vmatpush1.msra.mxu0 %v321
    %696 = vmatprep.subr.mxu0 %v326
    %697 = vmatpush1.msra.mxu0 %v325
    %698 = vmatprep.subr.mxu0 %v330
    %699 = vmatpush1.msra.mxu0 %v329
    %700 = vmatprep.subr.mxu0 %v334
    %701 = vmatpush1.msra.mxu0 %v333
    %702 = vmatprep.subr.mxu0 %v338
    %703 = vmatpush1.msra.mxu0 %v337
    %704 = vmatprep.subr.mxu0 %v342
    %705 = vmatpush1.msra.mxu0 %v341
    %706 = vmatprep.subr.mxu0 %v346
    %707 = vmatpush1.msra.mxu0 %v345
    %708 = vmatprep.subr.mxu0 %v350
    %709 = vmatpush1.msra.mxu0 %v349
    %710 = vmatprep.subr.mxu0 %v354
    %711 = vmatpush1.msra.mxu0 %v353
    %712 = vmatprep.subr.mxu0 %v358
    %713 = vmatpush1.msra.mxu0 %v357
    %714 = vmatprep.subr.mxu0 %v362
    %715 = vmatpush1.msra.mxu0 %v361
    %716 = vmatprep.mubr.f32.mxu0 %v94
    %717 = vmatmul.mubr.f32.gmra.mrb[0].mxu0 %v93
    %v718 = vpop.f32.mrb[0].mxu0
    %v719 = vadd.f32 %v630, %v718
    %v720 = vpop.f32.mrb[0].mxu0
    %v721 = vadd.f32 %v632, %v720
    %722 = vmatprep.mubr.f32.mxu0 %v98
    %723 = vmatmul.mubr.f32.gmra.mrb[0].mxu0 %v97
    %v724 = vpop.f32.mrb[0].mxu0
    %v725 = vadd.f32 %v636, %v724
    %v726 = vpop.f32.mrb[0].mxu0
    %v727 = vadd.f32 %v638, %v726
    %728 = vmatprep.mubr.f32.mxu0 %v102
    %729 = vmatmul.mubr.f32.gmra.mrb[0].mxu0 %v101
    %v730 = vpop.f32.mrb[0].mxu0
    %v731 = vadd.f32 %v642, %v730
    %v732 = vpop.f32.mrb[0].mxu0
    %v733 = vadd.f32 %v644, %v732
    %734 = vmatprep.mubr.f32.mxu0 %v106
    %735 = vmatmul.mubr.f32.gmra.mrb[0].mxu0 %v105
    %v736 = vpop.f32.mrb[0].mxu0
    %v737 = vadd.f32 %v648, %v736
    %v738 = vpop.f32.mrb[0].mxu0
    %v739 = vadd.f32 %v650, %v738
    %740 = vdwg.mxu0
    %v741 = vld [vmem:[#allocation8] sm:$0xff]
    %v742 = vld [vmem:[#allocation8 + $0x8] sm:$0xff]
    %v743 = vld [vmem:[#allocation8 + $0x10] sm:$0xff]
    %v744 = vld [vmem:[#allocation8 + $0x18] sm:$0xff]
    %v745 = vld [vmem:[#allocation8 + $0x20] sm:$0xff]
    %v746 = vld [vmem:[#allocation8 + $0x28] sm:$0xff]
    %v747 = vld [vmem:[#allocation8 + $0x30] sm:$0xff]
    %v748 = vld [vmem:[#allocation8 + $0x38] sm:$0xff]
    %v749 = vld [vmem:[#allocation8 + $0x40] sm:$0xff]
    %v750 = vld [vmem:[#allocation8 + $0x48] sm:$0xff]
    %v751 = vld [vmem:[#allocation8 + $0x50] sm:$0xff]
    %v752 = vld [vmem:[#allocation8 + $0x58] sm:$0xff]
    %v753 = vld [vmem:[#allocation8 + $0x60] sm:$0xff]
    %v754 = vld [vmem:[#allocation8 + $0x68] sm:$0xff]
    %v755 = vld [vmem:[#allocation8 + $0x70] sm:$0xff]
    %v756 = vld [vmem:[#allocation8 + $0x78] sm:$0xff]
    %v757 = vld [vmem:[#allocation8 + $0x80] sm:$0xff]
    %v758 = vld [vmem:[#allocation8 + $0x88] sm:$0xff]
    %v759 = vld [vmem:[#allocation8 + $0x90] sm:$0xff]
    %v760 = vld [vmem:[#allocation8 + $0x98] sm:$0xff]
    %v761 = vld [vmem:[#allocation8 + $0xa0] sm:$0xff]
    %v762 = vld [vmem:[#allocation8 + $0xa8] sm:$0xff]
    %v763 = vld [vmem:[#allocation8 + $0xb0] sm:$0xff]
    %v764 = vld [vmem:[#allocation8 + $0xb8] sm:$0xff]
    %v765 = vld [vmem:[#allocation8 + $0xc0] sm:$0xff]
    %v766 = vld [vmem:[#allocation8 + $0xc8] sm:$0xff]
    %v767 = vld [vmem:[#allocation8 + $0xd0] sm:$0xff]
    %v768 = vld [vmem:[#allocation8 + $0xd8] sm:$0xff]
    %v769 = vld [vmem:[#allocation8 + $0xe0] sm:$0xff]
    %v770 = vld [vmem:[#allocation8 + $0xe8] sm:$0xff]
    %v771 = vld [vmem:[#allocation8 + $0xf0] sm:$0xff]
    %v772 = vld [vmem:[#allocation8 + $0xf8] sm:$0xff]
    %773 = vmatprep.subr.mxu0 %v543
    %774 = vmatpush1.xpose.msra.mxu0 %v541
    %775 = vmatprep.subr.mxu0 %v549
    %776 = vmatpush1.xpose.msra.mxu0 %v547
    %777 = vmatprep.subr.mxu0 %v555
    %778 = vmatpush1.xpose.msra.mxu0 %v553
    %779 = vmatprep.subr.mxu0 %v561
    %780 = vmatpush1.xpose.msra.mxu0 %v559
    %781 = vmatprep.subr.mxu0 0.0
    %782 = vmatpush1.xpose.msra.mxu0 0.0
    %783 = vmatprep.subr.mxu0 0.0
    %784 = vmatpush1.xpose.msra.mxu0 0.0
    %785 = vmatprep.subr.mxu0 0.0
    %786 = vmatpush1.xpose.msra.mxu0 0.0
    %787 = vmatprep.subr.mxu0 0.0
    %788 = vmatpush1.xpose.msra.mxu0 0.0
    %789 = vmatprep.subr.mxu0 0.0
    %790 = vmatpush1.xpose.msra.mxu0 0.0
    %791 = vmatprep.subr.mxu0 0.0
    %792 = vmatpush1.xpose.msra.mxu0 0.0
    %793 = vmatprep.subr.mxu0 0.0
    %794 = vmatpush1.xpose.msra.mxu0 0.0
    %795 = vmatprep.subr.mxu0 0.0
    %796 = vmatpush1.xpose.msra.mxu0 0.0
    %797 = vmatprep.subr.mxu0 0.0
    %798 = vmatpush1.xpose.msra.mxu0 0.0
    %799 = vmatprep.subr.mxu0 0.0
    %800 = vmatpush1.xpose.msra.mxu0 0.0
    %801 = vmatprep.subr.mxu0 0.0
    %802 = vmatpush1.xpose.msra.mxu0 0.0
    %803 = vmatprep.subr.mxu0 0.0
    %804 = vmatpush1.xpose.msra.mxu0 0.0
    %805 = vmatprep.subr.mxu0 0.0
    %806 = vmatpush1.xpose.msra.mxu0 0.0
    %807 = vmatprep.subr.mxu0 0.0
    %808 = vmatpush1.xpose.msra.mxu0 0.0
    %809 = vmatprep.subr.mxu0 0.0
    %810 = vmatpush1.xpose.msra.mxu0 0.0
    %811 = vmatprep.subr.mxu0 0.0
    %812 = vmatpush1.xpose.msra.mxu0 0.0
    %813 = vmatprep.subr.mxu0 0.0
    %814 = vmatpush1.xpose.msra.mxu0 0.0
    %815 = vmatprep.subr.mxu0 0.0
    %816 = vmatpush1.xpose.msra.mxu0 0.0
    %817 = vmatprep.subr.mxu0 0.0
    %818 = vmatpush1.xpose.msra.mxu0 0.0
    %819 = vmatprep.subr.mxu0 0.0
    %820 = vmatpush1.xpose.msra.mxu0 0.0
    %821 = vmatprep.subr.mxu0 0.0
    %822 = vmatpush1.xpose.msra.mxu0 0.0
    %823 = vmatprep.subr.mxu0 0.0
    %824 = vmatpush1.xpose.msra.mxu0 0.0
    %825 = vmatprep.subr.mxu0 0.0
    %826 = vmatpush1.xpose.msra.mxu0 0.0
    %827 = vmatprep.subr.mxu0 0.0
    %828 = vmatpush1.xpose.msra.mxu0 0.0
    %829 = vmatprep.subr.mxu0 0.0
    %830 = vmatpush1.xpose.msra.mxu0 0.0
    %831 = vmatprep.subr.mxu0 0.0
    %832 = vmatpush1.xpose.msra.mxu0 0.0
    %833 = vmatprep.subr.mxu0 0.0
    %834 = vmatpush1.xpose.msra.mxu0 0.0
    %835 = vmatprep.subr.mxu0 0.0
    %836 = vmatpush1.xpose.msra.mxu0 0.0
    %837 = vmatprep.mubr.f32.mxu0 %v742
    %838 = vmatmul.mubr.f32.gmra.mrb[0].mxu0 %v741
    %v839 = vpop.f32.mrb[0].mxu0
    %v840 = vadd.f32 0.0, %v839
    %v841 = vpop.f32.mrb[0].mxu0
    %842 = vmatprep.mubr.f32.mxu0 %v746
    %843 = vmatmul.mubr.f32.gmra.mrb[0].mxu0 %v745
    %v844 = vpop.f32.mrb[0].mxu0
    %v845 = vadd.f32 0.0, %v844
    %v846 = vpop.f32.mrb[0].mxu0
    %847 = vmatprep.mubr.f32.mxu0 %v750
    %848 = vmatmul.mubr.f32.gmra.mrb[0].mxu0 %v749
    %v849 = vpop.f32.mrb[0].mxu0
    %v850 = vadd.f32 0.0, %v849
    %v851 = vpop.f32.mrb[0].mxu0
    %852 = vmatprep.mubr.f32.mxu0 %v754
    %853 = vmatmul.mubr.f32.gmra.mrb[0].mxu0 %v753
    %v854 = vpop.f32.mrb[0].mxu0
    %v855 = vadd.f32 0.0, %v854
    %v856 = vpop.f32.mrb[0].mxu0
    %857 = vmatprep.mubr.f32.mxu0 %v758
    %858 = vmatmul.mubr.f32.gmra.mrb[0].mxu0 %v757
    %v859 = vpop.f32.mrb[0].mxu0
    %v860 = vadd.f32 0.0, %v859
    %v861 = vpop.f32.mrb[0].mxu0
    %862 = vmatprep.mubr.f32.mxu0 %v762
    %863 = vmatmul.mubr.f32.gmra.mrb[0].mxu0 %v761
    %v864 = vpop.f32.mrb[0].mxu0
    %v865 = vadd.f32 0.0, %v864
    %v866 = vpop.f32.mrb[0].mxu0
    %867 = vmatprep.mubr.f32.mxu0 %v766
    %868 = vmatmul.mubr.f32.gmra.mrb[0].mxu0 %v765
    %v869 = vpop.f32.mrb[0].mxu0
    %v870 = vadd.f32 0.0, %v869
    %v871 = vpop.f32.mrb[0].mxu0
    %872 = vmatprep.mubr.f32.mxu0 %v770
    %873 = vmatmul.mubr.f32.gmra.mrb[0].mxu0 %v769
    %v874 = vpop.f32.mrb[0].mxu0
    %v875 = vadd.f32 0.0, %v874
    %v876 = vpop.f32.mrb[0].mxu0
    %877 = vdwg.mxu0
    %878 = vmatprep.subr.mxu0 %v721
    %879 = vmatpush1.xpose.msra.mxu0 %v719
    %880 = vmatprep.subr.mxu0 %v727
    %881 = vmatpush1.xpose.msra.mxu0 %v725
    %882 = vmatprep.subr.mxu0 %v733
    %883 = vmatpush1.xpose.msra.mxu0 %v731
    %884 = vmatprep.subr.mxu0 %v739
    %885 = vmatpush1.xpose.msra.mxu0 %v737
    %886 = vmatprep.subr.mxu0 0.0
    %887 = vmatpush1.xpose.msra.mxu0 0.0
    %888 = vmatprep.subr.mxu0 0.0
    %889 = vmatpush1.xpose.msra.mxu0 0.0
    %890 = vmatprep.subr.mxu0 0.0
    %891 = vmatpush1.xpose.msra.mxu0 0.0
    %892 = vmatprep.subr.mxu0 0.0
    %893 = vmatpush1.xpose.msra.mxu0 0.0
    %894 = vmatprep.subr.mxu0 0.0
    %895 = vmatpush1.xpose.msra.mxu0 0.0
    %896 = vmatprep.subr.mxu0 0.0
    %897 = vmatpush1.xpose.msra.mxu0 0.0
    %898 = vmatprep.subr.mxu0 0.0
    %899 = vmatpush1.xpose.msra.mxu0 0.0
    %900 = vmatprep.subr.mxu0 0.0
    %901 = vmatpush1.xpose.msra.mxu0 0.0
    %902 = vmatprep.subr.mxu0 0.0
    %903 = vmatpush1.xpose.msra.mxu0 0.0
    %904 = vmatprep.subr.mxu0 0.0
    %905 = vmatpush1.xpose.msra.mxu0 0.0
    %906 = vmatprep.subr.mxu0 0.0
    %907 = vmatpush1.xpose.msra.mxu0 0.0
    %908 = vmatprep.subr.mxu0 0.0
    %909 = vmatpush1.xpose.msra.mxu0 0.0
    %910 = vmatprep.subr.mxu0 0.0
    %911 = vmatpush1.xpose.msra.mxu0 0.0
    %912 = vmatprep.subr.mxu0 0.0
    %913 = vmatpush1.xpose.msra.mxu0 0.0
    %914 = vmatprep.subr.mxu0 0.0
    %915 = vmatpush1.xpose.msra.mxu0 0.0
    %916 = vmatprep.subr.mxu0 0.0
    %917 = vmatpush1.xpose.msra.mxu0 0.0
    %918 = vmatprep.subr.mxu0 0.0
    %919 = vmatpush1.xpose.msra.mxu0 0.0
    %920 = vmatprep.subr.mxu0 0.0
    %921 = vmatpush1.xpose.msra.mxu0 0.0
    %922 = vmatprep.subr.mxu0 0.0
    %923 = vmatpush1.xpose.msra.mxu0 0.0
    %924 = vmatprep.subr.mxu0 0.0
    %925 = vmatpush1.xpose.msra.mxu0 0.0
    %926 = vmatprep.subr.mxu0 0.0
    %927 = vmatpush1.xpose.msra.mxu0 0.0
    %928 = vmatprep.subr.mxu0 0.0
    %929 = vmatpush1.xpose.msra.mxu0 0.0
    %930 = vmatprep.subr.mxu0 0.0
    %931 = vmatpush1.xpose.msra.mxu0 0.0
    %932 = vmatprep.subr.mxu0 0.0
    %933 = vmatpush1.xpose.msra.mxu0 0.0
    %934 = vmatprep.subr.mxu0 0.0
    %935 = vmatpush1.xpose.msra.mxu0 0.0
    %936 = vmatprep.subr.mxu0 0.0
    %937 = vmatpush1.xpose.msra.mxu0 0.0
    %938 = vmatprep.subr.mxu0 0.0
    %939 = vmatpush1.xpose.msra.mxu0 0.0
    %940 = vmatprep.subr.mxu0 0.0
    %941 = vmatpush1.xpose.msra.mxu0 0.0
    %942 = vmatprep.mubr.f32.mxu0 %v744
    %943 = vmatmul.mubr.f32.gmra.mrb[0].mxu0 %v743
    %v944 = vpop.f32.mrb[0].mxu0
    %v945 = vadd.f32 %v840, %v944
    %v946 = vpop.f32.mrb[0].mxu0
    %947 = vmatprep.mubr.f32.mxu0 %v748
    %948 = vmatmul.mubr.f32.gmra.mrb[0].mxu0 %v747
    %v949 = vpop.f32.mrb[0].mxu0
    %v950 = vadd.f32 %v845, %v949
    %v951 = vpop.f32.mrb[0].mxu0
    %952 = vmatprep.mubr.f32.mxu0 %v752
    %953 = vmatmul.mubr.f32.gmra.mrb[0].mxu0 %v751
    %v954 = vpop.f32.mrb[0].mxu0
    %v955 = vadd.f32 %v850, %v954
    %v956 = vpop.f32.mrb[0].mxu0
    %957 = vmatprep.mubr.f32.mxu0 %v756
    %958 = vmatmul.mubr.f32.gmra.mrb[0].mxu0 %v755
    %v959 = vpop.f32.mrb[0].mxu0
    %v960 = vadd.f32 %v855, %v959
    %v961 = vpop.f32.mrb[0].mxu0
    %962 = vmatprep.mubr.f32.mxu0 %v760
    %963 = vmatmul.mubr.f32.gmra.mrb[0].mxu0 %v759
    %v964 = vpop.f32.mrb[0].mxu0
    %v965 = vadd.f32 %v860, %v964
    %v966 = vpop.f32.mrb[0].mxu0
    %967 = vmatprep.mubr.f32.mxu0 %v764
    %968 = vmatmul.mubr.f32.gmra.mrb[0].mxu0 %v763
    %v969 = vpop.f32.mrb[0].mxu0
    %v970 = vadd.f32 %v865, %v969
    %v971 = vpop.f32.mrb[0].mxu0
    %972 = vmatprep.mubr.f32.mxu0 %v768
    %973 = vmatmul.mubr.f32.gmra.mrb[0].mxu0 %v767
    %v974 = vpop.f32.mrb[0].mxu0
    %v975 = vadd.f32 %v870, %v974
    %v976 = vpop.f32.mrb[0].mxu0
    %977 = vmatprep.mubr.f32.mxu0 %v772
    %978 = vmatmul.mubr.f32.gmra.mrb[0].mxu0 %v771
    %v979 = vpop.f32.mrb[0].mxu0
    %v980 = vadd.f32 %v875, %v979
    %v981 = vpop.f32.mrb[0].mxu0
    %982 = vdwg.mxu0
    %vm983 = vcmask 261120
    %v984 = vsel %vm983, %v945, -inf
    %985 = vmax.xlane.f32.xlu0 %v984
    %v986 = vpop.xlane.xlu0 %985
    %v987 = vsel %vm983, %v950, -inf
    %988 = vmax.xlane.f32.xlu0 %v987
    %v989 = vpop.xlane.xlu0 %988
    %v990 = vsel %vm983, %v955, -inf
    %991 = vmax.xlane.f32.xlu0 %v990
    %v992 = vpop.xlane.xlu0 %991
    %v993 = vsel %vm983, %v960, -inf
    %994 = vmax.xlane.f32.xlu0 %v993
    %v995 = vpop.xlane.xlu0 %994
    %v996 = vsel %vm983, %v965, -inf
    %997 = vmax.xlane.f32.xlu0 %v996
    %v998 = vpop.xlane.xlu0 %997
    %v999 = vsel %vm983, %v970, -inf
    %1000 = vmax.xlane.f32.xlu0 %v999
    %v1001 = vpop.xlane.xlu0 %1000
    %v1002 = vsel %vm983, %v975, -inf
    %1003 = vmax.xlane.f32.xlu0 %v1002
    %v1004 = vpop.xlane.xlu0 %1003
    %v1005 = vsel %vm983, %v980, -inf
    %1006 = vmax.xlane.f32.xlu0 %v1005
    %v1007 = vpop.xlane.xlu0 %1006
    %v1008 = vsub.f32 %v945, %v986
    %v1009 = vsub.f32 %v950, %v989
    %v1010 = vsub.f32 %v955, %v992
    %v1011 = vsub.f32 %v960, %v995
    %v1012 = vsub.f32 %v965, %v998
    %v1013 = vsub.f32 %v970, %v1001
    %v1014 = vsub.f32 %v975, %v1004
    %v1015 = vsub.f32 %v980, %v1007
    %v1016 = vmul.f32 %v1008, 1.442695
    %v1017 = vpow.pop %v1016
    %v1018 = vmul.f32 %v1009, 1.442695
    %v1019 = vpow.pop %v1018
    %v1020 = vmul.f32 %v1010, 1.442695
    %v1021 = vpow.pop %v1020
    %v1022 = vmul.f32 %v1011, 1.442695
    %v1023 = vpow.pop %v1022
    %v1024 = vmul.f32 %v1012, 1.442695
    %v1025 = vpow.pop %v1024
    %v1026 = vmul.f32 %v1013, 1.442695
    %v1027 = vpow.pop %v1026
    %v1028 = vmul.f32 %v1014, 1.442695
    %v1029 = vpow.pop %v1028
    %v1030 = vmul.f32 %v1015, 1.442695
    %v1031 = vpow.pop %v1030
    %v1032 = vsel %vm983, %v1017, 0.0
    %1033 = vadd.xlane.f32.xlu0 %v1032
    %v1034 = vpop.xlane.xlu0 %1033
    %v1035 = vsel %vm983, %v1019, 0.0
    %1036 = vadd.xlane.f32.xlu0 %v1035
    %v1037 = vpop.xlane.xlu0 %1036
    %v1038 = vsel %vm983, %v1021, 0.0
    %1039 = vadd.xlane.f32.xlu0 %v1038
    %v1040 = vpop.xlane.xlu0 %1039
    %v1041 = vsel %vm983, %v1023, 0.0
    %1042 = vadd.xlane.f32.xlu0 %v1041
    %v1043 = vpop.xlane.xlu0 %1042
    %v1044 = vsel %vm983, %v1025, 0.0
    %1045 = vadd.xlane.f32.xlu0 %v1044
    %v1046 = vpop.xlane.xlu0 %1045
    %v1047 = vsel %vm983, %v1027, 0.0
    %1048 = vadd.xlane.f32.xlu0 %v1047
    %v1049 = vpop.xlane.xlu0 %1048
    %v1050 = vsel %vm983, %v1029, 0.0
    %1051 = vadd.xlane.f32.xlu0 %v1050
    %v1052 = vpop.xlane.xlu0 %1051
    %v1053 = vsel %vm983, %v1031, 0.0
    %1054 = vadd.xlane.f32.xlu0 %v1053
    %v1055 = vpop.xlane.xlu0 %1054
    %v1056 = vrcp.pop %v1034
    %v1057 = vmul.f32 %v1017, %v1056
    %v1058 = vrcp.pop %v1037
    %v1059 = vmul.f32 %v1019, %v1058
    %v1060 = vrcp.pop %v1040
    %v1061 = vmul.f32 %v1021, %v1060
    %v1062 = vrcp.pop %v1043
    %v1063 = vmul.f32 %v1023, %v1062
    %v1064 = vrcp.pop %v1046
    %v1065 = vmul.f32 %v1025, %v1064
    %v1066 = vrcp.pop %v1049
    %v1067 = vmul.f32 %v1027, %v1066
    %v1068 = vrcp.pop %v1052
    %v1069 = vmul.f32 %v1029, %v1068
    %v1070 = vrcp.pop %v1055
    %v1071 = vmul.f32 %v1031, %v1070
    %v1072 = vld [vmem:[#allocation10] sm:$0xff]
    %v1073 = vld [vmem:[#allocation10 + $0x8] sm:$0xff]
    %v1074 = vld [vmem:[#allocation10 + $0x10] sm:$0xff]
    %v1075 = vld [vmem:[#allocation10 + $0x18] sm:$0xff]
    %v1076 = vld [vmem:[#allocation10 + $0x20] sm:$0xff]
    %v1077 = vld [vmem:[#allocation10 + $0x28] sm:$0xff]
    %v1078 = vld [vmem:[#allocation10 + $0x30] sm:$0xff]
    %v1079 = vld [vmem:[#allocation10 + $0x38] sm:$0xff]
    %v1080 = vld [vmem:[#allocation10 + $0x40] sm:$0xff]
    %v1081 = vld [vmem:[#allocation10 + $0x48] sm:$0xff]
    %v1082 = vld [vmem:[#allocation10 + $0x50] sm:$0xff]
    %v1083 = vld [vmem:[#allocation10 + $0x58] sm:$0xff]
    %v1084 = vld [vmem:[#allocation10 + $0x60] sm:$0xff]
    %v1085 = vld [vmem:[#allocation10 + $0x68] sm:$0xff]
    %v1086 = vld [vmem:[#allocation10 + $0x70] sm:$0xff]
    %v1087 = vld [vmem:[#allocation10 + $0x78] sm:$0xff]
    %v1089 = vsel %vm983, %v1057, 0
    %v1092 = vsel %vm983, %v1059, 0
    %v1095 = vsel %vm983, %v1061, 0
    %v1098 = vsel %vm983, %v1063, 0
    %1100 = vmatprep.subr.mxu0 %v1073
    %1101 = vmatpush1.msra.mxu0 %v1072
    %1102 = vmatprep.subr.mxu0 %v1077
    %1103 = vmatpush1.msra.mxu0 %v1076
    %1104 = vmatprep.subr.mxu0 %v1081
    %1105 = vmatpush1.msra.mxu0 %v1080
    %1106 = vmatprep.subr.mxu0 %v1085
    %1107 = vmatpush1.msra.mxu0 %v1084
    %1108 = vmatprep.subr.mxu0 0.0
    %1109 = vmatpush1.msra.mxu0 0.0
    %1110 = vmatprep.subr.mxu0 0.0
    %1111 = vmatpush1.msra.mxu0 0.0
    %1112 = vmatprep.subr.mxu0 0.0
    %1113 = vmatpush1.msra.mxu0 0.0
    %1114 = vmatprep.subr.mxu0 0.0
    %1115 = vmatpush1.msra.mxu0 0.0
    %1116 = vmatprep.subr.mxu0 0.0
    %1117 = vmatpush1.msra.mxu0 0.0
    %1118 = vmatprep.subr.mxu0 0.0
    %1119 = vmatpush1.msra.mxu0 0.0
    %1120 = vmatprep.subr.mxu0 0.0
    %1121 = vmatpush1.msra.mxu0 0.0
    %1122 = vmatprep.subr.mxu0 0.0
    %1123 = vmatpush1.msra.mxu0 0.0
    %1124 = vmatprep.subr.mxu0 0.0
    %1125 = vmatpush1.msra.mxu0 0.0
    %1126 = vmatprep.subr.mxu0 0.0
    %1127 = vmatpush1.msra.mxu0 0.0
    %1128 = vmatprep.subr.mxu0 0.0
    %1129 = vmatpush1.msra.mxu0 0.0
    %1130 = vmatprep.subr.mxu0 0.0
    %1131 = vmatpush1.msra.mxu0 0.0
    %1132 = vmatprep.subr.mxu0 0.0
    %1133 = vmatpush1.msra.mxu0 0.0
    %1134 = vmatprep.subr.mxu0 0.0
    %1135 = vmatpush1.msra.mxu0 0.0
    %1136 = vmatprep.subr.mxu0 0.0
    %1137 = vmatpush1.msra.mxu0 0.0
    %1138 = vmatprep.subr.mxu0 0.0
    %1139 = vmatpush1.msra.mxu0 0.0
    %1140 = vmatprep.subr.mxu0 0.0
    %1141 = vmatpush1.msra.mxu0 0.0
    %1142 = vmatprep.subr.mxu0 0.0
    %1143 = vmatpush1.msra.mxu0 0.0
    %1144 = vmatprep.subr.mxu0 0.0
    %1145 = vmatpush1.msra.mxu0 0.0
    %1146 = vmatprep.subr.mxu0 0.0
    %1147 = vmatpush1.msra.mxu0 0.0
    %1148 = vmatprep.subr.mxu0 0.0
    %1149 = vmatpush1.msra.mxu0 0.0
    %1150 = vmatprep.subr.mxu0 0.0
    %1151 = vmatpush1.msra.mxu0 0.0
    %1152 = vmatprep.subr.mxu0 0.0
    %1153 = vmatpush1.msra.mxu0 0.0
    %1154 = vmatprep.subr.mxu0 0.0
    %1155 = vmatpush1.msra.mxu0 0.0
    %1156 = vmatprep.subr.mxu0 0.0
    %1157 = vmatpush1.msra.mxu0 0.0
    %1158 = vmatprep.subr.mxu0 0.0
    %1159 = vmatpush1.msra.mxu0 0.0
    %1160 = vmatprep.subr.mxu0 0.0
    %1161 = vmatpush1.msra.mxu0 0.0
    %1162 = vmatprep.subr.mxu0 0.0
    %1163 = vmatpush1.msra.mxu0 0.0
    %1164 = vmatprep.mubr.f32.mxu0 0.0
    %1165 = vmatmul.mubr.f32.gmra.mrb[0].mxu0 %v1089
    %v1166 = vpop.f32.mrb[0].mxu0
    %v1167 = vadd.f32 0.0, %v1166
    %v1168 = vpop.f32.mrb[0].mxu0
    %v1169 = vadd.f32 0.0, %v1168
    %1170 = vmatprep.mubr.f32.mxu0 0.0
    %1171 = vmatmul.mubr.f32.gmra.mrb[0].mxu0 %v1092
    %v1172 = vpop.f32.mrb[0].mxu0
    %v1173 = vadd.f32 0.0, %v1172
    %v1174 = vpop.f32.mrb[0].mxu0
    %v1175 = vadd.f32 0.0, %v1174
    %1176 = vmatprep.mubr.f32.mxu0 0.0
    %1177 = vmatmul.mubr.f32.gmra.mrb[0].mxu0 %v1095
    %v1178 = vpop.f32.mrb[0].mxu0
    %v1179 = vadd.f32 0.0, %v1178
    %v1180 = vpop.f32.mrb[0].mxu0
    %v1181 = vadd.f32 0.0, %v1180
    %1182 = vmatprep.mubr.f32.mxu0 0.0
    %1183 = vmatmul.mubr.f32.gmra.mrb[0].mxu0 %v1098
    %v1184 = vpop.f32.mrb[0].mxu0
    %v1185 = vadd.f32 0.0, %v1184
    %v1186 = vpop.f32.mrb[0].mxu0
    %v1187 = vadd.f32 0.0, %v1186
    %1188 = vdwg.mxu0
    %1189 = vmatprep.subr.mxu0 %v1075
    %1190 = vmatpush1.msra.mxu0 %v1074
    %1191 = vmatprep.subr.mxu0 %v1079
    %1192 = vmatpush1.msra.mxu0 %v1078
    %1193 = vmatprep.subr.mxu0 %v1083
    %1194 = vmatpush1.msra.mxu0 %v1082
    %1195 = vmatprep.subr.mxu0 %v1087
    %1196 = vmatpush1.msra.mxu0 %v1086
    %1197 = vmatprep.subr.mxu0 0.0
    %1198 = vmatpush1.msra.mxu0 0.0
    %1199 = vmatprep.subr.mxu0 0.0
    %1200 = vmatpush1.msra.mxu0 0.0
    %1201 = vmatprep.subr.mxu0 0.0
    %1202 = vmatpush1.msra.mxu0 0.0
    %1203 = vmatprep.subr.mxu0 0.0
    %1204 = vmatpush1.msra.mxu0 0.0
    %1205 = vmatprep.subr.mxu0 0.0
    %1206 = vmatpush1.msra.mxu0 0.0
    %1207 = vmatprep.subr.mxu0 0.0
    %1208 = vmatpush1.msra.mxu0 0.0
    %1209 = vmatprep.subr.mxu0 0.0
    %1210 = vmatpush1.msra.mxu0 0.0
    %1211 = vmatprep.subr.mxu0 0.0
    %1212 = vmatpush1.msra.mxu0 0.0
    %1213 = vmatprep.subr.mxu0 0.0
    %1214 = vmatpush1.msra.mxu0 0.0
    %1215 = vmatprep.subr.mxu0 0.0
    %1216 = vmatpush1.msra.mxu0 0.0
    %1217 = vmatprep.subr.mxu0 0.0
    %1218 = vmatpush1.msra.mxu0 0.0
    %1219 = vmatprep.subr.mxu0 0.0
    %1220 = vmatpush1.msra.mxu0 0.0
    %1221 = vmatprep.subr.mxu0 0.0
    %1222 = vmatpush1.msra.mxu0 0.0
    %1223 = vmatprep.subr.mxu0 0.0
    %1224 = vmatpush1.msra.mxu0 0.0
    %1225 = vmatprep.subr.mxu0 0.0
    %1226 = vmatpush1.msra.mxu0 0.0
    %1227 = vmatprep.subr.mxu0 0.0
    %1228 = vmatpush1.msra.mxu0 0.0
    %1229 = vmatprep.subr.mxu0 0.0
    %1230 = vmatpush1.msra.mxu0 0.0
    %1231 = vmatprep.subr.mxu0 0.0
    %1232 = vmatpush1.msra.mxu0 0.0
    %1233 = vmatprep.subr.mxu0 0.0
    %1234 = vmatpush1.msra.mxu0 0.0
    %1235 = vmatprep.subr.mxu0 0.0
    %1236 = vmatpush1.msra.mxu0 0.0
    %1237 = vmatprep.subr.mxu0 0.0
    %1238 = vmatpush1.msra.mxu0 0.0
    %1239 = vmatprep.subr.mxu0 0.0
    %1240 = vmatpush1.msra.mxu0 0.0
    %1241 = vmatprep.subr.mxu0 0.0
    %1242 = vmatpush1.msra.mxu0 0.0
    %1243 = vmatprep.subr.mxu0 0.0
    %1244 = vmatpush1.msra.mxu0 0.0
    %1245 = vmatprep.subr.mxu0 0.0
    %1246 = vmatpush1.msra.mxu0 0.0
    %1247 = vmatprep.subr.mxu0 0.0
    %1248 = vmatpush1.msra.mxu0 0.0
    %1249 = vmatprep.subr.mxu0 0.0
    %1250 = vmatpush1.msra.mxu0 0.0
    %1251 = vmatprep.subr.mxu0 0.0
    %1252 = vmatpush1.msra.mxu0 0.0
    %1253 = vmatprep.mubr.f32.mxu0 0.0
    %1254 = vmatmul.mubr.f32.gmra.mrb[0].mxu0 %v1089
    %v1255 = vpop.f32.mrb[0].mxu0
    %v1256 = vadd.f32 0.0, %v1255
    %v1257 = vpop.f32.mrb[0].mxu0
    %v1258 = vadd.f32 0.0, %v1257
    %1259 = vmatprep.mubr.f32.mxu0 0.0
    %1260 = vmatmul.mubr.f32.gmra.mrb[0].mxu0 %v1092
    %v1261 = vpop.f32.mrb[0].mxu0
    %v1262 = vadd.f32 0.0, %v1261
    %v1263 = vpop.f32.mrb[0].mxu0
    %v1264 = vadd.f32 0.0, %v1263
    %1265 = vmatprep.mubr.f32.mxu0 0.0
    %1266 = vmatmul.mubr.f32.gmra.mrb[0].mxu0 %v1095
    %v1267 = vpop.f32.mrb[0].mxu0
    %v1268 = vadd.f32 0.0, %v1267
    %v1269 = vpop.f32.mrb[0].mxu0
    %v1270 = vadd.f32 0.0, %v1269
    %1271 = vmatprep.mubr.f32.mxu0 0.0
    %1272 = vmatmul.mubr.f32.gmra.mrb[0].mxu0 %v1098
    %v1273 = vpop.f32.mrb[0].mxu0
    %v1274 = vadd.f32 0.0, %v1273
    %v1275 = vpop.f32.mrb[0].mxu0
    %v1276 = vadd.f32 0.0, %v1275
    %1277 = vdwg.mxu0
    %1278 = vst [vmem:[#allocation4] sm:$0xff] %v1167
    %1279 = vst [vmem:[#allocation4 + $0x8] sm:$0xff] %v1169
    %1280 = vst [vmem:[#allocation4 + $0x10] sm:$0xff] %v1256
    %1281 = vst [vmem:[#allocation4 + $0x18] sm:$0xff] %v1258
    %1282 = vst [vmem:[#allocation4 + $0x20] sm:$0xff] %v1173
    %1283 = vst [vmem:[#allocation4 + $0x28] sm:$0xff] %v1175
    %1284 = vst [vmem:[#allocation4 + $0x30] sm:$0xff] %v1262
    %1285 = vst [vmem:[#allocation4 + $0x38] sm:$0xff] %v1264
    %1286 = vst [vmem:[#allocation4 + $0x40] sm:$0xff] %v1179
    %1287 = vst [vmem:[#allocation4 + $0x48] sm:$0xff] %v1181
    %1288 = vst [vmem:[#allocation4 + $0x50] sm:$0xff] %v1268
    %1289 = vst [vmem:[#allocation4 + $0x58] sm:$0xff] %v1270
    %1290 = vst [vmem:[#allocation4 + $0x60] sm:$0xff] %v1185
    %1291 = vst [vmem:[#allocation4 + $0x68] sm:$0xff] %v1187
    %1292 = vst [vmem:[#allocation4 + $0x70] sm:$0xff] %v1274
    %1293 = vst [vmem:[#allocation4 + $0x78] sm:$0xff] %v1276
    %s1294 = scalar_lea.vmem [#allocation10], 128
    %v1295 = vld [vmem:[%s1294] sm:$0xff]
    %v1296 = vld [vmem:[%s1294 + $0x8] sm:$0xff]
    %v1297 = vld [vmem:[%s1294 + $0x10] sm:$0xff]
    %v1298 = vld [vmem:[%s1294 + $0x18] sm:$0xff]
    %v1299 = vld [vmem:[%s1294 + $0x20] sm:$0xff]
    %v1300 = vld [vmem:[%s1294 + $0x28] sm:$0xff]
    %v1301 = vld [vmem:[%s1294 + $0x30] sm:$0xff]
    %v1302 = vld [vmem:[%s1294 + $0x38] sm:$0xff]
    %v1303 = vld [vmem:[%s1294 + $0x40] sm:$0xff]
    %v1304 = vld [vmem:[%s1294 + $0x48] sm:$0xff]
    %v1305 = vld [vmem:[%s1294 + $0x50] sm:$0xff]
    %v1306 = vld [vmem:[%s1294 + $0x58] sm:$0xff]
    %v1307 = vld [vmem:[%s1294 + $0x60] sm:$0xff]
    %v1308 = vld [vmem:[%s1294 + $0x68] sm:$0xff]
    %v1309 = vld [vmem:[%s1294 + $0x70] sm:$0xff]
    %v1310 = vld [vmem:[%s1294 + $0x78] sm:$0xff]
    %v1312 = vsel %vm983, %v1065, 0
    %v1315 = vsel %vm983, %v1067, 0
    %v1318 = vsel %vm983, %v1069, 0
    %v1321 = vsel %vm983, %v1071, 0
    %1323 = vmatprep.subr.mxu0 %v1296
    %1324 = vmatpush1.msra.mxu0 %v1295
    %1325 = vmatprep.subr.mxu0 %v1300
    %1326 = vmatpush1.msra.mxu0 %v1299
    %1327 = vmatprep.subr.mxu0 %v1304
    %1328 = vmatpush1.msra.mxu0 %v1303
    %1329 = vmatprep.subr.mxu0 %v1308
    %1330 = vmatpush1.msra.mxu0 %v1307
    %1331 = vmatprep.subr.mxu0 0.0
    %1332 = vmatpush1.msra.mxu0 0.0
    %1333 = vmatprep.subr.mxu0 0.0
    %1334 = vmatpush1.msra.mxu0 0.0
    %1335 = vmatprep.subr.mxu0 0.0
    %1336 = vmatpush1.msra.mxu0 0.0
    %1337 = vmatprep.subr.mxu0 0.0
    %1338 = vmatpush1.msra.mxu0 0.0
    %1339 = vmatprep.subr.mxu0 0.0
    %1340 = vmatpush1.msra.mxu0 0.0
    %1341 = vmatprep.subr.mxu0 0.0
    %1342 = vmatpush1.msra.mxu0 0.0
    %1343 = vmatprep.subr.mxu0 0.0
    %1344 = vmatpush1.msra.mxu0 0.0
    %1345 = vmatprep.subr.mxu0 0.0
    %1346 = vmatpush1.msra.mxu0 0.0
    %1347 = vmatprep.subr.mxu0 0.0
    %1348 = vmatpush1.msra.mxu0 0.0
    %1349 = vmatprep.subr.mxu0 0.0
    %1350 = vmatpush1.msra.mxu0 0.0
    %1351 = vmatprep.subr.mxu0 0.0
    %1352 = vmatpush1.msra.mxu0 0.0
    %1353 = vmatprep.subr.mxu0 0.0
    %1354 = vmatpush1.msra.mxu0 0.0
    %1355 = vmatprep.subr.mxu0 0.0
    %1356 = vmatpush1.msra.mxu0 0.0
    %1357 = vmatprep.subr.mxu0 0.0
    %1358 = vmatpush1.msra.mxu0 0.0
    %1359 = vmatprep.subr.mxu0 0.0
    %1360 = vmatpush1.msra.mxu0 0.0
    %1361 = vmatprep.subr.mxu0 0.0
    %1362 = vmatpush1.msra.mxu0 0.0
    %1363 = vmatprep.subr.mxu0 0.0
    %1364 = vmatpush1.msra.mxu0 0.0
    %1365 = vmatprep.subr.mxu0 0.0
    %1366 = vmatpush1.msra.mxu0 0.0
    %1367 = vmatprep.subr.mxu0 0.0
    %1368 = vmatpush1.msra.mxu0 0.0
    %1369 = vmatprep.subr.mxu0 0.0
    %1370 = vmatpush1.msra.mxu0 0.0
    %1371 = vmatprep.subr.mxu0 0.0
    %1372 = vmatpush1.msra.mxu0 0.0
    %1373 = vmatprep.subr.mxu0 0.0
    %1374 = vmatpush1.msra.mxu0 0.0
    %1375 = vmatprep.subr.mxu0 0.0
    %1376 = vmatpush1.msra.mxu0 0.0
    %1377 = vmatprep.subr.mxu0 0.0
    %1378 = vmatpush1.msra.mxu0 0.0
    %1379 = vmatprep.subr.mxu0 0.0
    %1380 = vmatpush1.msra.mxu0 0.0
    %1381 = vmatprep.subr.mxu0 0.0
    %1382 = vmatpush1.msra.mxu0 0.0
    %1383 = vmatprep.subr.mxu0 0.0
    %1384 = vmatpush1.msra.mxu0 0.0
    %1385 = vmatprep.subr.mxu0 0.0
    %1386 = vmatpush1.msra.mxu0 0.0
    %1387 = vmatprep.mubr.f32.mxu0 0.0
    %1388 = vmatmul.mubr.f32.gmra.mrb[0].mxu0 %v1312
    %v1389 = vpop.f32.mrb[0].mxu0
    %v1390 = vadd.f32 0.0, %v1389
    %v1391 = vpop.f32.mrb[0].mxu0
    %v1392 = vadd.f32 0.0, %v1391
    %1393 = vmatprep.mubr.f32.mxu0 0.0
    %1394 = vmatmul.mubr.f32.gmra.mrb[0].mxu0 %v1315
    %v1395 = vpop.f32.mrb[0].mxu0
    %v1396 = vadd.f32 0.0, %v1395
    %v1397 = vpop.f32.mrb[0].mxu0
    %v1398 = vadd.f32 0.0, %v1397
    %1399 = vmatprep.mubr.f32.mxu0 0.0
    %1400 = vmatmul.mubr.f32.gmra.mrb[0].mxu0 %v1318
    %v1401 = vpop.f32.mrb[0].mxu0
    %v1402 = vadd.f32 0.0, %v1401
    %v1403 = vpop.f32.mrb[0].mxu0
    %v1404 = vadd.f32 0.0, %v1403
    %1405 = vmatprep.mubr.f32.mxu0 0.0
    %1406 = vmatmul.mubr.f32.gmra.mrb[0].mxu0 %v1321
    %v1407 = vpop.f32.mrb[0].mxu0
    %v1408 = vadd.f32 0.0, %v1407
    %v1409 = vpop.f32.mrb[0].mxu0
    %v1410 = vadd.f32 0.0, %v1409
    %1411 = vdwg.mxu0
    %1412 = vmatprep.subr.mxu0 %v1298
    %1413 = vmatpush1.msra.mxu0 %v1297
    %1414 = vmatprep.subr.mxu0 %v1302
    %1415 = vmatpush1.msra.mxu0 %v1301
    %1416 = vmatprep.subr.mxu0 %v1306
    %1417 = vmatpush1.msra.mxu0 %v1305
    %1418 = vmatprep.subr.mxu0 %v1310
    %1419 = vmatpush1.msra.mxu0 %v1309
    %1420 = vmatprep.subr.mxu0 0.0
    %1421 = vmatpush1.msra.mxu0 0.0
    %1422 = vmatprep.subr.mxu0 0.0
    %1423 = vmatpush1.msra.mxu0 0.0
    %1424 = vmatprep.subr.mxu0 0.0
    %1425 = vmatpush1.msra.mxu0 0.0
    %1426 = vmatprep.subr.mxu0 0.0
    %1427 = vmatpush1.msra.mxu0 0.0
    %1428 = vmatprep.subr.mxu0 0.0
    %1429 = vmatpush1.msra.mxu0 0.0
    %1430 = vmatprep.subr.mxu0 0.0
    %1431 = vmatpush1.msra.mxu0 0.0
    %1432 = vmatprep.subr.mxu0 0.0
    %1433 = vmatpush1.msra.mxu0 0.0
    %1434 = vmatprep.subr.mxu0 0.0
    %1435 = vmatpush1.msra.mxu0 0.0
    %1436 = vmatprep.subr.mxu0 0.0
    %1437 = vmatpush1.msra.mxu0 0.0
    %1438 = vmatprep.subr.mxu0 0.0
    %1439 = vmatpush1.msra.mxu0 0.0
    %1440 = vmatprep.subr.mxu0 0.0
    %1441 = vmatpush1.msra.mxu0 0.0
    %1442 = vmatprep.subr.mxu0 0.0
    %1443 = vmatpush1.msra.mxu0 0.0
    %1444 = vmatprep.subr.mxu0 0.0
    %1445 = vmatpush1.msra.mxu0 0.0
    %1446 = vmatprep.subr.mxu0 0.0
    %1447 = vmatpush1.msra.mxu0 0.0
    %1448 = vmatprep.subr.mxu0 0.0
    %1449 = vmatpush1.msra.mxu0 0.0
    %1450 = vmatprep.subr.mxu0 0.0
    %1451 = vmatpush1.msra.mxu0 0.0
    %1452 = vmatprep.subr.mxu0 0.0
    %1453 = vmatpush1.msra.mxu0 0.0
    %1454 = vmatprep.subr.mxu0 0.0
    %1455 = vmatpush1.msra.mxu0 0.0
    %1456 = vmatprep.subr.mxu0 0.0
    %1457 = vmatpush1.msra.mxu0 0.0
    %1458 = vmatprep.subr.mxu0 0.0
    %1459 = vmatpush1.msra.mxu0 0.0
    %1460 = vmatprep.subr.mxu0 0.0
    %1461 = vmatpush1.msra.mxu0 0.0
    %1462 = vmatprep.subr.mxu0 0.0
    %1463 = vmatpush1.msra.mxu0 0.0
    %1464 = vmatprep.subr.mxu0 0.0
    %1465 = vmatpush1.msra.mxu0 0.0
    %1466 = vmatprep.subr.mxu0 0.0
    %1467 = vmatpush1.msra.mxu0 0.0
    %1468 = vmatprep.subr.mxu0 0.0
    %1469 = vmatpush1.msra.mxu0 0.0
    %1470 = vmatprep.subr.mxu0 0.0
    %1471 = vmatpush1.msra.mxu0 0.0
    %1472 = vmatprep.subr.mxu0 0.0
    %1473 = vmatpush1.msra.mxu0 0.0
    %1474 = vmatprep.subr.mxu0 0.0
    %1475 = vmatpush1.msra.mxu0 0.0
    %1476 = vmatprep.mubr.f32.mxu0 0.0
    %1477 = vmatmul.mubr.f32.gmra.mrb[0].mxu0 %v1312
    %v1478 = vpop.f32.mrb[0].mxu0
    %v1479 = vadd.f32 0.0, %v1478
    %v1480 = vpop.f32.mrb[0].mxu0
    %v1481 = vadd.f32 0.0, %v1480
    %1482 = vmatprep.mubr.f32.mxu0 0.0
    %1483 = vmatmul.mubr.f32.gmra.mrb[0].mxu0 %v1315
    %v1484 = vpop.f32.mrb[0].mxu0
    %v1485 = vadd.f32 0.0, %v1484
    %v1486 = vpop.f32.mrb[0].mxu0
    %v1487 = vadd.f32 0.0, %v1486
    %1488 = vmatprep.mubr.f32.mxu0 0.0
    %1489 = vmatmul.mubr.f32.gmra.mrb[0].mxu0 %v1318
    %v1490 = vpop.f32.mrb[0].mxu0
    %v1491 = vadd.f32 0.0, %v1490
    %v1492 = vpop.f32.mrb[0].mxu0
    %v1493 = vadd.f32 0.0, %v1492
    %1494 = vmatprep.mubr.f32.mxu0 0.0
    %1495 = vmatmul.mubr.f32.gmra.mrb[0].mxu0 %v1321
    %v1496 = vpop.f32.mrb[0].mxu0
    %v1497 = vadd.f32 0.0, %v1496
    %v1498 = vpop.f32.mrb[0].mxu0
    %v1499 = vadd.f32 0.0, %v1498
    %1500 = vdwg.mxu0
    %1501 = vst [vmem:[#allocation4 + $0x80] sm:$0xff] %v1390
    %1502 = vst [vmem:[#allocation4 + $0x88] sm:$0xff] %v1392
    %1503 = vst [vmem:[#allocation4 + $0x90] sm:$0xff] %v1479
    %1504 = vst [vmem:[#allocation4 + $0x98] sm:$0xff] %v1481
    %1505 = vst [vmem:[#allocation4 + $0xa0] sm:$0xff] %v1396
    %1506 = vst [vmem:[#allocation4 + $0xa8] sm:$0xff] %v1398
    %1507 = vst [vmem:[#allocation4 + $0xb0] sm:$0xff] %v1485
    %1508 = vst [vmem:[#allocation4 + $0xb8] sm:$0xff] %v1487
    %1509 = vst [vmem:[#allocation4 + $0xc0] sm:$0xff] %v1402
    %1510 = vst [vmem:[#allocation4 + $0xc8] sm:$0xff] %v1404
    %1511 = vst [vmem:[#allocation4 + $0xd0] sm:$0xff] %v1491
    %1512 = vst [vmem:[#allocation4 + $0xd8] sm:$0xff] %v1493
    %1513 = vst [vmem:[#allocation4 + $0xe0] sm:$0xff] %v1408
    %1514 = vst [vmem:[#allocation4 + $0xe8] sm:$0xff] %v1410
    %1515 = vst [vmem:[#allocation4 + $0xf0] sm:$0xff] %v1497
    %1516 = vst [vmem:[#allocation4 + $0xf8] sm:$0xff] %v1499
    %s1517 = smul.u32 8, 64
    %s1518 = smul.u32 %s1517, 4
    %s1519 = sshll.u32 %s1518, 4
    %1520 = dma.done [#allocation3], %s1519
    %v1521 = vld [vmem:[#allocation4] sm:$0xff]
    %v1522 = vld [vmem:[#allocation4 + $0x8] sm:$0xff]
    %v1523 = vld [vmem:[#allocation4 + $0x10] sm:$0xff]
    %v1524 = vld [vmem:[#allocation4 + $0x18] sm:$0xff]
    %v1525 = vld [vmem:[#allocation4 + $0x20] sm:$0xff]
    %v1526 = vld [vmem:[#allocation4 + $0x28] sm:$0xff]
    %v1527 = vld [vmem:[#allocation4 + $0x30] sm:$0xff]
    %v1528 = vld [vmem:[#allocation4 + $0x38] sm:$0xff]
    %v1529 = vld [vmem:[#allocation4 + $0x40] sm:$0xff]
    %v1530 = vld [vmem:[#allocation4 + $0x48] sm:$0xff]
    %v1531 = vld [vmem:[#allocation4 + $0x50] sm:$0xff]
    %v1532 = vld [vmem:[#allocation4 + $0x58] sm:$0xff]
    %v1533 = vld [vmem:[#allocation4 + $0x60] sm:$0xff]
    %v1534 = vld [vmem:[#allocation4 + $0x68] sm:$0xff]
    %v1535 = vld [vmem:[#allocation4 + $0x70] sm:$0xff]
    %v1536 = vld [vmem:[#allocation4 + $0x78] sm:$0xff]
    %v1537 = vld [vmem:[#allocation4 + $0x80] sm:$0xff]
    %v1538 = vld [vmem:[#allocation4 + $0x88] sm:$0xff]
    %v1539 = vld [vmem:[#allocation4 + $0x90] sm:$0xff]
    %v1540 = vld [vmem:[#allocation4 + $0x98] sm:$0xff]
    %v1541 = vld [vmem:[#allocation4 + $0xa0] sm:$0xff]
    %v1542 = vld [vmem:[#allocation4 + $0xa8] sm:$0xff]
    %v1543 = vld [vmem:[#allocation4 + $0xb0] sm:$0xff]
    %v1544 = vld [vmem:[#allocation4 + $0xb8] sm:$0xff]
    %v1545 = vld [vmem:[#allocation4 + $0xc0] sm:$0xff]
    %v1546 = vld [vmem:[#allocation4 + $0xc8] sm:$0xff]
    %v1547 = vld [vmem:[#allocation4 + $0xd0] sm:$0xff]
    %v1548 = vld [vmem:[#allocation4 + $0xd8] sm:$0xff]
    %v1549 = vld [vmem:[#allocation4 + $0xe0] sm:$0xff]
    %v1550 = vld [vmem:[#allocation4 + $0xe8] sm:$0xff]
    %v1551 = vld [vmem:[#allocation4 + $0xf0] sm:$0xff]
    %v1552 = vld [vmem:[#allocation4 + $0xf8] sm:$0xff]
    %v1553 = vld [vmem:[#allocation2] sm:$0xff]
    %v1554 = vld [vmem:[#allocation2 + $0x8] sm:$0xff]
    %v1555 = vld [vmem:[#allocation2 + $0x10] sm:$0xff]
    %v1556 = vld [vmem:[#allocation2 + $0x18] sm:$0xff]
    %v1557 = vld [vmem:[#allocation2 + $0x20] sm:$0xff]
    %v1558 = vld [vmem:[#allocation2 + $0x28] sm:$0xff]
    %v1559 = vld [vmem:[#allocation2 + $0x30] sm:$0xff]
    %v1560 = vld [vmem:[#allocation2 + $0x38] sm:$0xff]
    %v1561 = vld [vmem:[#allocation2 + $0x40] sm:$0xff]
    %v1562 = vld [vmem:[#allocation2 + $0x48] sm:$0xff]
    %v1563 = vld [vmem:[#allocation2 + $0x50] sm:$0xff]
    %v1564 = vld [vmem:[#allocation2 + $0x58] sm:$0xff]
    %v1565 = vld [vmem:[#allocation2 + $0x60] sm:$0xff]
    %v1566 = vld [vmem:[#allocation2 + $0x68] sm:$0xff]
    %v1567 = vld [vmem:[#allocation2 + $0x70] sm:$0xff]
    %v1568 = vld [vmem:[#allocation2 + $0x78] sm:$0xff]
    %v1569 = vld [vmem:[#allocation2 + $0x80] sm:$0xff]
    %v1570 = vld [vmem:[#allocation2 + $0x88] sm:$0xff]
    %v1571 = vld [vmem:[#allocation2 + $0x90] sm:$0xff]
    %v1572 = vld [vmem:[#allocation2 + $0x98] sm:$0xff]
    %v1573 = vld [vmem:[#allocation2 + $0xa0] sm:$0xff]
    %v1574 = vld [vmem:[#allocation2 + $0xa8] sm:$0xff]
    %v1575 = vld [vmem:[#allocation2 + $0xb0] sm:$0xff]
    %v1576 = vld [vmem:[#allocation2 + $0xb8] sm:$0xff]
    %v1577 = vld [vmem:[#allocation2 + $0xc0] sm:$0xff]
    %v1578 = vld [vmem:[#allocation2 + $0xc8] sm:$0xff]
    %v1579 = vld [vmem:[#allocation2 + $0xd0] sm:$0xff]
    %v1580 = vld [vmem:[#allocation2 + $0xd8] sm:$0xff]
    %v1581 = vld [vmem:[#allocation2 + $0xe0] sm:$0xff]
    %v1582 = vld [vmem:[#allocation2 + $0xe8] sm:$0xff]
    %v1583 = vld [vmem:[#allocation2 + $0xf0] sm:$0xff]
    %v1584 = vld [vmem:[#allocation2 + $0xf8] sm:$0xff]
    %v1585 = vld [vmem:[#allocation2 + $0x100] sm:$0xff]
    %v1586 = vld [vmem:[#allocation2 + $0x108] sm:$0xff]
    %v1587 = vld [vmem:[#allocation2 + $0x110] sm:$0xff]
    %v1588 = vld [vmem:[#allocation2 + $0x118] sm:$0xff]
    %v1589 = vld [vmem:[#allocation2 + $0x120] sm:$0xff]
    %v1590 = vld [vmem:[#allocation2 + $0x128] sm:$0xff]
    %v1591 = vld [vmem:[#allocation2 + $0x130] sm:$0xff]
    %v1592 = vld [vmem:[#allocation2 + $0x138] sm:$0xff]
    %v1593 = vld [vmem:[#allocation2 + $0x140] sm:$0xff]
    %v1594 = vld [vmem:[#allocation2 + $0x148] sm:$0xff]
    %v1595 = vld [vmem:[#allocation2 + $0x150] sm:$0xff]
    %v1596 = vld [vmem:[#allocation2 + $0x158] sm:$0xff]
    %v1597 = vld [vmem:[#allocation2 + $0x160] sm:$0xff]
    %v1598 = vld [vmem:[#allocation2 + $0x168] sm:$0xff]
    %v1599 = vld [vmem:[#allocation2 + $0x170] sm:$0xff]
    %v1600 = vld [vmem:[#allocation2 + $0x178] sm:$0xff]
    %v1601 = vld [vmem:[#allocation2 + $0x180] sm:$0xff]
    %v1602 = vld [vmem:[#allocation2 + $0x188] sm:$0xff]
    %v1603 = vld [vmem:[#allocation2 + $0x190] sm:$0xff]
    %v1604 = vld [vmem:[#allocation2 + $0x198] sm:$0xff]
    %v1605 = vld [vmem:[#allocation2 + $0x1a0] sm:$0xff]
    %v1606 = vld [vmem:[#allocation2 + $0x1a8] sm:$0xff]
    %v1607 = vld [vmem:[#allocation2 + $0x1b0] sm:$0xff]
    %v1608 = vld [vmem:[#allocation2 + $0x1b8] sm:$0xff]
    %v1609 = vld [vmem:[#allocation2 + $0x1c0] sm:$0xff]
    %v1610 = vld [vmem:[#allocation2 + $0x1c8] sm:$0xff]
    %v1611 = vld [vmem:[#allocation2 + $0x1d0] sm:$0xff]
    %v1612 = vld [vmem:[#allocation2 + $0x1d8] sm:$0xff]
    %v1613 = vld [vmem:[#allocation2 + $0x1e0] sm:$0xff]
    %v1614 = vld [vmem:[#allocation2 + $0x1e8] sm:$0xff]
    %v1615 = vld [vmem:[#allocation2 + $0x1f0] sm:$0xff]
    %v1616 = vld [vmem:[#allocation2 + $0x1f8] sm:$0xff]
    %v1617 = vld [vmem:[#allocation2 + $0x200] sm:$0xff]
    %v1618 = vld [vmem:[#allocation2 + $0x208] sm:$0xff]
    %v1619 = vld [vmem:[#allocation2 + $0x210] sm:$0xff]
    %v1620 = vld [vmem:[#allocation2 + $0x218] sm:$0xff]
    %v1621 = vld [vmem:[#allocation2 + $0x220] sm:$0xff]
    %v1622 = vld [vmem:[#allocation2 + $0x228] sm:$0xff]
    %v1623 = vld [vmem:[#allocation2 + $0x230] sm:$0xff]
    %v1624 = vld [vmem:[#allocation2 + $0x238] sm:$0xff]
    %v1625 = vld [vmem:[#allocation2 + $0x240] sm:$0xff]
    %v1626 = vld [vmem:[#allocation2 + $0x248] sm:$0xff]
    %v1627 = vld [vmem:[#allocation2 + $0x250] sm:$0xff]
    %v1628 = vld [vmem:[#allocation2 + $0x258] sm:$0xff]
    %v1629 = vld [vmem:[#allocation2 + $0x260] sm:$0xff]
    %v1630 = vld [vmem:[#allocation2 + $0x268] sm:$0xff]
    %v1631 = vld [vmem:[#allocation2 + $0x270] sm:$0xff]
    %v1632 = vld [vmem:[#allocation2 + $0x278] sm:$0xff]
    %v1633 = vld [vmem:[#allocation2 + $0x280] sm:$0xff]
    %v1634 = vld [vmem:[#allocation2 + $0x288] sm:$0xff]
    %v1635 = vld [vmem:[#allocation2 + $0x290] sm:$0xff]
    %v1636 = vld [vmem:[#allocation2 + $0x298] sm:$0xff]
    %v1637 = vld [vmem:[#allocation2 + $0x2a0] sm:$0xff]
    %v1638 = vld [vmem:[#allocation2 + $0x2a8] sm:$0xff]
    %v1639 = vld [vmem:[#allocation2 + $0x2b0] sm:$0xff]
    %v1640 = vld [vmem:[#allocation2 + $0x2b8] sm:$0xff]
    %v1641 = vld [vmem:[#allocation2 + $0x2c0] sm:$0xff]
    %v1642 = vld [vmem:[#allocation2 + $0x2c8] sm:$0xff]
    %v1643 = vld [vmem:[#allocation2 + $0x2d0] sm:$0xff]
    %v1644 = vld [vmem:[#allocation2 + $0x2d8] sm:$0xff]
    %v1645 = vld [vmem:[#allocation2 + $0x2e0] sm:$0xff]
    %v1646 = vld [vmem:[#allocation2 + $0x2e8] sm:$0xff]
    %v1647 = vld [vmem:[#allocation2 + $0x2f0] sm:$0xff]
    %v1648 = vld [vmem:[#allocation2 + $0x2f8] sm:$0xff]
    %v1649 = vld [vmem:[#allocation2 + $0x300] sm:$0xff]
    %v1650 = vld [vmem:[#allocation2 + $0x308] sm:$0xff]
    %v1651 = vld [vmem:[#allocation2 + $0x310] sm:$0xff]
    %v1652 = vld [vmem:[#allocation2 + $0x318] sm:$0xff]
    %v1653 = vld [vmem:[#allocation2 + $0x320] sm:$0xff]
    %v1654 = vld [vmem:[#allocation2 + $0x328] sm:$0xff]
    %v1655 = vld [vmem:[#allocation2 + $0x330] sm:$0xff]
    %v1656 = vld [vmem:[#allocation2 + $0x338] sm:$0xff]
    %v1657 = vld [vmem:[#allocation2 + $0x340] sm:$0xff]
    %v1658 = vld [vmem:[#allocation2 + $0x348] sm:$0xff]
    %v1659 = vld [vmem:[#allocation2 + $0x350] sm:$0xff]
    %v1660 = vld [vmem:[#allocation2 + $0x358] sm:$0xff]
    %v1661 = vld [vmem:[#allocation2 + $0x360] sm:$0xff]
    %v1662 = vld [vmem:[#allocation2 + $0x368] sm:$0xff]
    %v1663 = vld [vmem:[#allocation2 + $0x370] sm:$0xff]
    %v1664 = vld [vmem:[#allocation2 + $0x378] sm:$0xff]
    %v1665 = vld [vmem:[#allocation2 + $0x380] sm:$0xff]
    %v1666 = vld [vmem:[#allocation2 + $0x388] sm:$0xff]
    %v1667 = vld [vmem:[#allocation2 + $0x390] sm:$0xff]
    %v1668 = vld [vmem:[#allocation2 + $0x398] sm:$0xff]
    %v1669 = vld [vmem:[#allocation2 + $0x3a0] sm:$0xff]
    %v1670 = vld [vmem:[#allocation2 + $0x3a8] sm:$0xff]
    %v1671 = vld [vmem:[#allocation2 + $0x3b0] sm:$0xff]
    %v1672 = vld [vmem:[#allocation2 + $0x3b8] sm:$0xff]
    %v1673 = vld [vmem:[#allocation2 + $0x3c0] sm:$0xff]
    %v1674 = vld [vmem:[#allocation2 + $0x3c8] sm:$0xff]
    %v1675 = vld [vmem:[#allocation2 + $0x3d0] sm:$0xff]
    %v1676 = vld [vmem:[#allocation2 + $0x3d8] sm:$0xff]
    %v1677 = vld [vmem:[#allocation2 + $0x3e0] sm:$0xff]
    %v1678 = vld [vmem:[#allocation2 + $0x3e8] sm:$0xff]
    %v1679 = vld [vmem:[#allocation2 + $0x3f0] sm:$0xff]
    %v1680 = vld [vmem:[#allocation2 + $0x3f8] sm:$0xff]
    %v1681 = vld [vmem:[#allocation2 + $0x400] sm:$0xff]
    %v1682 = vld [vmem:[#allocation2 + $0x408] sm:$0xff]
    %v1683 = vld [vmem:[#allocation2 + $0x410] sm:$0xff]
    %v1684 = vld [vmem:[#allocation2 + $0x418] sm:$0xff]
    %v1685 = vld [vmem:[#allocation2 + $0x420] sm:$0xff]
    %v1686 = vld [vmem:[#allocation2 + $0x428] sm:$0xff]
    %v1687 = vld [vmem:[#allocation2 + $0x430] sm:$0xff]
    %v1688 = vld [vmem:[#allocation2 + $0x438] sm:$0xff]
    %v1689 = vld [vmem:[#allocation2 + $0x440] sm:$0xff]
    %v1690 = vld [vmem:[#allocation2 + $0x448] sm:$0xff]
    %v1691 = vld [vmem:[#allocation2 + $0x450] sm:$0xff]
    %v1692 = vld [vmem:[#allocation2 + $0x458] sm:$0xff]
    %v1693 = vld [vmem:[#allocation2 + $0x460] sm:$0xff]
    %v1694 = vld [vmem:[#allocation2 + $0x468] sm:$0xff]
    %v1695 = vld [vmem:[#allocation2 + $0x470] sm:$0xff]
    %v1696 = vld [vmem:[#allocation2 + $0x478] sm:$0xff]
    %v1697 = vld [vmem:[#allocation2 + $0x480] sm:$0xff]
    %v1698 = vld [vmem:[#allocation2 + $0x488] sm:$0xff]
    %v1699 = vld [vmem:[#allocation2 + $0x490] sm:$0xff]
    %v1700 = vld [vmem:[#allocation2 + $0x498] sm:$0xff]
    %v1701 = vld [vmem:[#allocation2 + $0x4a0] sm:$0xff]
    %v1702 = vld [vmem:[#allocation2 + $0x4a8] sm:$0xff]
    %v1703 = vld [vmem:[#allocation2 + $0x4b0] sm:$0xff]
    %v1704 = vld [vmem:[#allocation2 + $0x4b8] sm:$0xff]
    %v1705 = vld [vmem:[#allocation2 + $0x4c0] sm:$0xff]
    %v1706 = vld [vmem:[#allocation2 + $0x4c8] sm:$0xff]
    %v1707 = vld [vmem:[#allocation2 + $0x4d0] sm:$0xff]
    %v1708 = vld [vmem:[#allocation2 + $0x4d8] sm:$0xff]
    %v1709 = vld [vmem:[#allocation2 + $0x4e0] sm:$0xff]
    %v1710 = vld [vmem:[#allocation2 + $0x4e8] sm:$0xff]
    %v1711 = vld [vmem:[#allocation2 + $0x4f0] sm:$0xff]
    %v1712 = vld [vmem:[#allocation2 + $0x4f8] sm:$0xff]
    %v1713 = vld [vmem:[#allocation2 + $0x500] sm:$0xff]
    %v1714 = vld [vmem:[#allocation2 + $0x508] sm:$0xff]
    %v1715 = vld [vmem:[#allocation2 + $0x510] sm:$0xff]
    %v1716 = vld [vmem:[#allocation2 + $0x518] sm:$0xff]
    %v1717 = vld [vmem:[#allocation2 + $0x520] sm:$0xff]
    %v1718 = vld [vmem:[#allocation2 + $0x528] sm:$0xff]
    %v1719 = vld [vmem:[#allocation2 + $0x530] sm:$0xff]
    %v1720 = vld [vmem:[#allocation2 + $0x538] sm:$0xff]
    %v1721 = vld [vmem:[#allocation2 + $0x540] sm:$0xff]
    %v1722 = vld [vmem:[#allocation2 + $0x548] sm:$0xff]
    %v1723 = vld [vmem:[#allocation2 + $0x550] sm:$0xff]
    %v1724 = vld [vmem:[#allocation2 + $0x558] sm:$0xff]
    %v1725 = vld [vmem:[#allocation2 + $0x560] sm:$0xff]
    %v1726 = vld [vmem:[#allocation2 + $0x568] sm:$0xff]
    %v1727 = vld [vmem:[#allocation2 + $0x570] sm:$0xff]
    %v1728 = vld [vmem:[#allocation2 + $0x578] sm:$0xff]
    %v1729 = vld [vmem:[#allocation2 + $0x580] sm:$0xff]
    %v1730 = vld [vmem:[#allocation2 + $0x588] sm:$0xff]
    %v1731 = vld [vmem:[#allocation2 + $0x590] sm:$0xff]
    %v1732 = vld [vmem:[#allocation2 + $0x598] sm:$0xff]
    %v1733 = vld [vmem:[#allocation2 + $0x5a0] sm:$0xff]
    %v1734 = vld [vmem:[#allocation2 + $0x5a8] sm:$0xff]
    %v1735 = vld [vmem:[#allocation2 + $0x5b0] sm:$0xff]
    %v1736 = vld [vmem:[#allocation2 + $0x5b8] sm:$0xff]
    %v1737 = vld [vmem:[#allocation2 + $0x5c0] sm:$0xff]
    %v1738 = vld [vmem:[#allocation2 + $0x5c8] sm:$0xff]
    %v1739 = vld [vmem:[#allocation2 + $0x5d0] sm:$0xff]
    %v1740 = vld [vmem:[#allocation2 + $0x5d8] sm:$0xff]
    %v1741 = vld [vmem:[#allocation2 + $0x5e0] sm:$0xff]
    %v1742 = vld [vmem:[#allocation2 + $0x5e8] sm:$0xff]
    %v1743 = vld [vmem:[#allocation2 + $0x5f0] sm:$0xff]
    %v1744 = vld [vmem:[#allocation2 + $0x5f8] sm:$0xff]
    %v1745 = vld [vmem:[#allocation2 + $0x600] sm:$0xff]
    %v1746 = vld [vmem:[#allocation2 + $0x608] sm:$0xff]
    %v1747 = vld [vmem:[#allocation2 + $0x610] sm:$0xff]
    %v1748 = vld [vmem:[#allocation2 + $0x618] sm:$0xff]
    %v1749 = vld [vmem:[#allocation2 + $0x620] sm:$0xff]
    %v1750 = vld [vmem:[#allocation2 + $0x628] sm:$0xff]
    %v1751 = vld [vmem:[#allocation2 + $0x630] sm:$0xff]
    %v1752 = vld [vmem:[#allocation2 + $0x638] sm:$0xff]
    %v1753 = vld [vmem:[#allocation2 + $0x640] sm:$0xff]
    %v1754 = vld [vmem:[#allocation2 + $0x648] sm:$0xff]
    %v1755 = vld [vmem:[#allocation2 + $0x650] sm:$0xff]
    %v1756 = vld [vmem:[#allocation2 + $0x658] sm:$0xff]
    %v1757 = vld [vmem:[#allocation2 + $0x660] sm:$0xff]
    %v1758 = vld [vmem:[#allocation2 + $0x668] sm:$0xff]
    %v1759 = vld [vmem:[#allocation2 + $0x670] sm:$0xff]
    %v1760 = vld [vmem:[#allocation2 + $0x678] sm:$0xff]
    %v1761 = vld [vmem:[#allocation2 + $0x680] sm:$0xff]
    %v1762 = vld [vmem:[#allocation2 + $0x688] sm:$0xff]
    %v1763 = vld [vmem:[#allocation2 + $0x690] sm:$0xff]
    %v1764 = vld [vmem:[#allocation2 + $0x698] sm:$0xff]
    %v1765 = vld [vmem:[#allocation2 + $0x6a0] sm:$0xff]
    %v1766 = vld [vmem:[#allocation2 + $0x6a8] sm:$0xff]
    %v1767 = vld [vmem:[#allocation2 + $0x6b0] sm:$0xff]
    %v1768 = vld [vmem:[#allocation2 + $0x6b8] sm:$0xff]
    %v1769 = vld [vmem:[#allocation2 + $0x6c0] sm:$0xff]
    %v1770 = vld [vmem:[#allocation2 + $0x6c8] sm:$0xff]
    %v1771 = vld [vmem:[#allocation2 + $0x6d0] sm:$0xff]
    %v1772 = vld [vmem:[#allocation2 + $0x6d8] sm:$0xff]
    %v1773 = vld [vmem:[#allocation2 + $0x6e0] sm:$0xff]
    %v1774 = vld [vmem:[#allocation2 + $0x6e8] sm:$0xff]
    %v1775 = vld [vmem:[#allocation2 + $0x6f0] sm:$0xff]
    %v1776 = vld [vmem:[#allocation2 + $0x6f8] sm:$0xff]
    %v1777 = vld [vmem:[#allocation2 + $0x700] sm:$0xff]
    %v1778 = vld [vmem:[#allocation2 + $0x708] sm:$0xff]
    %v1779 = vld [vmem:[#allocation2 + $0x710] sm:$0xff]
    %v1780 = vld [vmem:[#allocation2 + $0x718] sm:$0xff]
    %v1781 = vld [vmem:[#allocation2 + $0x720] sm:$0xff]
    %v1782 = vld [vmem:[#allocation2 + $0x728] sm:$0xff]
    %v1783 = vld [vmem:[#allocation2 + $0x730] sm:$0xff]
    %v1784 = vld [vmem:[#allocation2 + $0x738] sm:$0xff]
    %v1785 = vld [vmem:[#allocation2 + $0x740] sm:$0xff]
    %v1786 = vld [vmem:[#allocation2 + $0x748] sm:$0xff]
    %v1787 = vld [vmem:[#allocation2 + $0x750] sm:$0xff]
    %v1788 = vld [vmem:[#allocation2 + $0x758] sm:$0xff]
    %v1789 = vld [vmem:[#allocation2 + $0x760] sm:$0xff]
    %v1790 = vld [vmem:[#allocation2 + $0x768] sm:$0xff]
    %v1791 = vld [vmem:[#allocation2 + $0x770] sm:$0xff]
    %v1792 = vld [vmem:[#allocation2 + $0x778] sm:$0xff]
    %v1793 = vld [vmem:[#allocation2 + $0x780] sm:$0xff]
    %v1794 = vld [vmem:[#allocation2 + $0x788] sm:$0xff]
    %v1795 = vld [vmem:[#allocation2 + $0x790] sm:$0xff]
    %v1796 = vld [vmem:[#allocation2 + $0x798] sm:$0xff]
    %v1797 = vld [vmem:[#allocation2 + $0x7a0] sm:$0xff]
    %v1798 = vld [vmem:[#allocation2 + $0x7a8] sm:$0xff]
    %v1799 = vld [vmem:[#allocation2 + $0x7b0] sm:$0xff]
    %v1800 = vld [vmem:[#allocation2 + $0x7b8] sm:$0xff]
    %v1801 = vld [vmem:[#allocation2 + $0x7c0] sm:$0xff]
    %v1802 = vld [vmem:[#allocation2 + $0x7c8] sm:$0xff]
    %v1803 = vld [vmem:[#allocation2 + $0x7d0] sm:$0xff]
    %v1804 = vld [vmem:[#allocation2 + $0x7d8] sm:$0xff]
    %v1805 = vld [vmem:[#allocation2 + $0x7e0] sm:$0xff]
    %v1806 = vld [vmem:[#allocation2 + $0x7e8] sm:$0xff]
    %v1807 = vld [vmem:[#allocation2 + $0x7f0] sm:$0xff]
    %v1808 = vld [vmem:[#allocation2 + $0x7f8] sm:$0xff]
    %v1809 = vld [vmem:[%s6] sm:$0xf]
    %v1811 = vlaneseq
    %v1812 = vshrl.u32 %v1811, 7
    %v1813 = vsub.s32 0, %v1812
    %v1814 = vrot.slane %v1809, %v1813
    %v1815 = vlaneseq
    %v1816 = vshrl.u32 %v1815, 7
    %v1817 = vsub.s32 1, %v1816
    %v1818 = vrot.slane %v1809, %v1817
    %v1819 = vlaneseq
    %v1820 = vshrl.u32 %v1819, 7
    %v1821 = vsub.s32 2, %v1820
    %v1822 = vrot.slane %v1809, %v1821
    %v1823 = vlaneseq
    %v1824 = vshrl.u32 %v1823, 7
    %v1825 = vsub.s32 3, %v1824
    %v1826 = vrot.slane %v1809, %v1825
    %1831 = vmatprep.subr.mxu0 %v1554
    %1832 = vmatpush1.msra.mxu0 %v1553
    %1833 = vmatprep.subr.mxu0 %v1558
    %1834 = vmatpush1.msra.mxu0 %v1557
    %1835 = vmatprep.subr.mxu0 %v1562
    %1836 = vmatpush1.msra.mxu0 %v1561
    %1837 = vmatprep.subr.mxu0 %v1566
    %1838 = vmatpush1.msra.mxu0 %v1565
    %1839 = vmatprep.subr.mxu0 %v1570
    %1840 = vmatpush1.msra.mxu0 %v1569
    %1841 = vmatprep.subr.mxu0 %v1574
    %1842 = vmatpush1.msra.mxu0 %v1573
    %1843 = vmatprep.subr.mxu0 %v1578
    %1844 = vmatpush1.msra.mxu0 %v1577
    %1845 = vmatprep.subr.mxu0 %v1582
    %1846 = vmatpush1.msra.mxu0 %v1581
    %1847 = vmatprep.subr.mxu0 %v1586
    %1848 = vmatpush1.msra.mxu0 %v1585
    %1849 = vmatprep.subr.mxu0 %v1590
    %1850 = vmatpush1.msra.mxu0 %v1589
    %1851 = vmatprep.subr.mxu0 %v1594
    %1852 = vmatpush1.msra.mxu0 %v1593
    %1853 = vmatprep.subr.mxu0 %v1598
    %1854 = vmatpush1.msra.mxu0 %v1597
    %1855 = vmatprep.subr.mxu0 %v1602
    %1856 = vmatpush1.msra.mxu0 %v1601
    %1857 = vmatprep.subr.mxu0 %v1606
    %1858 = vmatpush1.msra.mxu0 %v1605
    %1859 = vmatprep.subr.mxu0 %v1610
    %1860 = vmatpush1.msra.mxu0 %v1609
    %1861 = vmatprep.subr.mxu0 %v1614
    %1862 = vmatpush1.msra.mxu0 %v1613
    %1863 = vmatprep.subr.mxu0 %v1618
    %1864 = vmatpush1.msra.mxu0 %v1617
    %1865 = vmatprep.subr.mxu0 %v1622
    %1866 = vmatpush1.msra.mxu0 %v1621
    %1867 = vmatprep.subr.mxu0 %v1626
    %1868 = vmatpush1.msra.mxu0 %v1625
    %1869 = vmatprep.subr.mxu0 %v1630
    %1870 = vmatpush1.msra.mxu0 %v1629
    %1871 = vmatprep.subr.mxu0 %v1634
    %1872 = vmatpush1.msra.mxu0 %v1633
    %1873 = vmatprep.subr.mxu0 %v1638
    %1874 = vmatpush1.msra.mxu0 %v1637
    %1875 = vmatprep.subr.mxu0 %v1642
    %1876 = vmatpush1.msra.mxu0 %v1641
    %1877 = vmatprep.subr.mxu0 %v1646
    %1878 = vmatpush1.msra.mxu0 %v1645
    %1879 = vmatprep.subr.mxu0 %v1650
    %1880 = vmatpush1.msra.mxu0 %v1649
    %1881 = vmatprep.subr.mxu0 %v1654
    %1882 = vmatpush1.msra.mxu0 %v1653
    %1883 = vmatprep.subr.mxu0 %v1658
    %1884 = vmatpush1.msra.mxu0 %v1657
    %1885 = vmatprep.subr.mxu0 %v1662
    %1886 = vmatpush1.msra.mxu0 %v1661
    %1887 = vmatprep.subr.mxu0 %v1666
    %1888 = vmatpush1.msra.mxu0 %v1665
    %1889 = vmatprep.subr.mxu0 %v1670
    %1890 = vmatpush1.msra.mxu0 %v1669
    %1891 = vmatprep.subr.mxu0 %v1674
    %1892 = vmatpush1.msra.mxu0 %v1673
    %1893 = vmatprep.subr.mxu0 %v1678
    %1894 = vmatpush1.msra.mxu0 %v1677
    %1895 = vmatprep.mubr.f32.mxu0 %v1522
    %1896 = vmatmul.mubr.f32.gmra.mrb[0].mxu0 %v1521
    %v1897 = vpop.f32.mrb[0].mxu0
    %v1898 = vadd.f32 %v1814, %v1897
    %v1899 = vpop.f32.mrb[0].mxu0
    %v1900 = vadd.f32 %v1818, %v1899
    %1901 = vmatprep.mubr.f32.mxu0 %v1526
    %1902 = vmatmul.mubr.f32.gmra.mrb[0].mxu0 %v1525
    %v1903 = vpop.f32.mrb[0].mxu0
    %v1904 = vadd.f32 %v1814, %v1903
    %v1905 = vpop.f32.mrb[0].mxu0
    %v1906 = vadd.f32 %v1818, %v1905
    %1907 = vmatprep.mubr.f32.mxu0 %v1530
    %1908 = vmatmul.mubr.f32.gmra.mrb[0].mxu0 %v1529
    %v1909 = vpop.f32.mrb[0].mxu0
    %v1910 = vadd.f32 %v1814, %v1909
    %v1911 = vpop.f32.mrb[0].mxu0
    %v1912 = vadd.f32 %v1818, %v1911
    %1913 = vmatprep.mubr.f32.mxu0 %v1534
    %1914 = vmatmul.mubr.f32.gmra.mrb[0].mxu0 %v1533
    %v1915 = vpop.f32.mrb[0].mxu0
    %v1916 = vadd.f32 %v1814, %v1915
    %v1917 = vpop.f32.mrb[0].mxu0
    %v1918 = vadd.f32 %v1818, %v1917
    %1919 = vmatprep.mubr.f32.mxu0 %v1538
    %1920 = vmatmul.mubr.f32.gmra.mrb[0].mxu0 %v1537
    %v1921 = vpop.f32.mrb[0].mxu0
    %v1922 = vadd.f32 %v1814, %v1921
    %v1923 = vpop.f32.mrb[0].mxu0
    %v1924 = vadd.f32 %v1818, %v1923
    %1925 = vmatprep.mubr.f32.mxu0 %v1542
    %1926 = vmatmul.mubr.f32.gmra.mrb[0].mxu0 %v1541
    %v1927 = vpop.f32.mrb[0].mxu0
    %v1928 = vadd.f32 %v1814, %v1927
    %v1929 = vpop.f32.mrb[0].mxu0
    %v1930 = vadd.f32 %v1818, %v1929
    %1931 = vmatprep.mubr.f32.mxu0 %v1546
    %1932 = vmatmul.mubr.f32.gmra.mrb[0].mxu0 %v1545
    %v1933 = vpop.f32.mrb[0].mxu0
    %v1934 = vadd.f32 %v1814, %v1933
    %v1935 = vpop.f32.mrb[0].mxu0
    %v1936 = vadd.f32 %v1818, %v1935
    %1937 = vmatprep.mubr.f32.mxu0 %v1550
    %1938 = vmatmul.mubr.f32.gmra.mrb[0].mxu0 %v1549
    %v1939 = vpop.f32.mrb[0].mxu0
    %v1940 = vadd.f32 %v1814, %v1939
    %v1941 = vpop.f32.mrb[0].mxu0
    %v1942 = vadd.f32 %v1818, %v1941
    %1943 = vdwg.mxu0
    %1944 = vmatprep.subr.mxu0 %v1682
    %1945 = vmatpush1.msra.mxu0 %v1681
    %1946 = vmatprep.subr.mxu0 %v1686
    %1947 = vmatpush1.msra.mxu0 %v1685
    %1948 = vmatprep.subr.mxu0 %v1690
    %1949 = vmatpush1.msra.mxu0 %v1689
    %1950 = vmatprep.subr.mxu0 %v1694
    %1951 = vmatpush1.msra.mxu0 %v1693
    %1952 = vmatprep.subr.mxu0 %v1698
    %1953 = vmatpush1.msra.mxu0 %v1697
    %1954 = vmatprep.subr.mxu0 %v1702
    %1955 = vmatpush1.msra.mxu0 %v1701
    %1956 = vmatprep.subr.mxu0 %v1706
    %1957 = vmatpush1.msra.mxu0 %v1705
    %1958 = vmatprep.subr.mxu0 %v1710
    %1959 = vmatpush1.msra.mxu0 %v1709
    %1960 = vmatprep.subr.mxu0 %v1714
    %1961 = vmatpush1.msra.mxu0 %v1713
    %1962 = vmatprep.subr.mxu0 %v1718
    %1963 = vmatpush1.msra.mxu0 %v1717
    %1964 = vmatprep.subr.mxu0 %v1722
    %1965 = vmatpush1.msra.mxu0 %v1721
    %1966 = vmatprep.subr.mxu0 %v1726
    %1967 = vmatpush1.msra.mxu0 %v1725
    %1968 = vmatprep.subr.mxu0 %v1730
    %1969 = vmatpush1.msra.mxu0 %v1729
    %1970 = vmatprep.subr.mxu0 %v1734
    %1971 = vmatpush1.msra.mxu0 %v1733
    %1972 = vmatprep.subr.mxu0 %v1738
    %1973 = vmatpush1.msra.mxu0 %v1737
    %1974 = vmatprep.subr.mxu0 %v1742
    %1975 = vmatpush1.msra.mxu0 %v1741
    %1976 = vmatprep.subr.mxu0 %v1746
    %1977 = vmatpush1.msra.mxu0 %v1745
    %1978 = vmatprep.subr.mxu0 %v1750
    %1979 = vmatpush1.msra.mxu0 %v1749
    %1980 = vmatprep.subr.mxu0 %v1754
    %1981 = vmatpush1.msra.mxu0 %v1753
    %1982 = vmatprep.subr.mxu0 %v1758
    %1983 = vmatpush1.msra.mxu0 %v1757
    %1984 = vmatprep.subr.mxu0 %v1762
    %1985 = vmatpush1.msra.mxu0 %v1761
    %1986 = vmatprep.subr.mxu0 %v1766
    %1987 = vmatpush1.msra.mxu0 %v1765
    %1988 = vmatprep.subr.mxu0 %v1770
    %1989 = vmatpush1.msra.mxu0 %v1769
    %1990 = vmatprep.subr.mxu0 %v1774
    %1991 = vmatpush1.msra.mxu0 %v1773
    %1992 = vmatprep.subr.mxu0 %v1778
    %1993 = vmatpush1.msra.mxu0 %v1777
    %1994 = vmatprep.subr.mxu0 %v1782
    %1995 = vmatpush1.msra.mxu0 %v1781
    %1996 = vmatprep.subr.mxu0 %v1786
    %1997 = vmatpush1.msra.mxu0 %v1785
    %1998 = vmatprep.subr.mxu0 %v1790
    %1999 = vmatpush1.msra.mxu0 %v1789
    %2000 = vmatprep.subr.mxu0 %v1794
    %2001 = vmatpush1.msra.mxu0 %v1793
    %2002 = vmatprep.subr.mxu0 %v1798
    %2003 = vmatpush1.msra.mxu0 %v1797
    %2004 = vmatprep.subr.mxu0 %v1802
    %2005 = vmatpush1.msra.mxu0 %v1801
    %2006 = vmatprep.subr.mxu0 %v1806
    %2007 = vmatpush1.msra.mxu0 %v1805
    %2008 = vmatprep.mubr.f32.mxu0 %v1524
    %2009 = vmatmul.mubr.f32.gmra.mrb[0].mxu0 %v1523
    %v2010 = vpop.f32.mrb[0].mxu0
    %v2011 = vadd.f32 %v1898, %v2010
    %v2012 = vpop.f32.mrb[0].mxu0
    %v2013 = vadd.f32 %v1900, %v2012
    %2014 = vmatprep.mubr.f32.mxu0 %v1528
    %2015 = vmatmul.mubr.f32.gmra.mrb[0].mxu0 %v1527
    %v2016 = vpop.f32.mrb[0].mxu0
    %v2017 = vadd.f32 %v1904, %v2016
    %v2018 = vpop.f32.mrb[0].mxu0
    %v2019 = vadd.f32 %v1906, %v2018
    %2020 = vmatprep.mubr.f32.mxu0 %v1532
    %2021 = vmatmul.mubr.f32.gmra.mrb[0].mxu0 %v1531
    %v2022 = vpop.f32.mrb[0].mxu0
    %v2023 = vadd.f32 %v1910, %v2022
    %v2024 = vpop.f32.mrb[0].mxu0
    %v2025 = vadd.f32 %v1912, %v2024
    %2026 = vmatprep.mubr.f32.mxu0 %v1536
    %2027 = vmatmul.mubr.f32.gmra.mrb[0].mxu0 %v1535
    %v2028 = vpop.f32.mrb[0].mxu0
    %v2029 = vadd.f32 %v1916, %v2028
    %v2030 = vpop.f32.mrb[0].mxu0
    %v2031 = vadd.f32 %v1918, %v2030
    %2032 = vmatprep.mubr.f32.mxu0 %v1540
    %2033 = vmatmul.mubr.f32.gmra.mrb[0].mxu0 %v1539
    %v2034 = vpop.f32.mrb[0].mxu0
    %v2035 = vadd.f32 %v1922, %v2034
    %v2036 = vpop.f32.mrb[0].mxu0
    %v2037 = vadd.f32 %v1924, %v2036
    %2038 = vmatprep.mubr.f32.mxu0 %v1544
    %2039 = vmatmul.mubr.f32.gmra.mrb[0].mxu0 %v1543
    %v2040 = vpop.f32.mrb[0].mxu0
    %v2041 = vadd.f32 %v1928, %v2040
    %v2042 = vpop.f32.mrb[0].mxu0
    %v2043 = vadd.f32 %v1930, %v2042
    %2044 = vmatprep.mubr.f32.mxu0 %v1548
    %2045 = vmatmul.mubr.f32.gmra.mrb[0].mxu0 %v1547
    %v2046 = vpop.f32.mrb[0].mxu0
    %v2047 = vadd.f32 %v1934, %v2046
    %v2048 = vpop.f32.mrb[0].mxu0
    %v2049 = vadd.f32 %v1936, %v2048
    %2050 = vmatprep.mubr.f32.mxu0 %v1552
    %2051 = vmatmul.mubr.f32.gmra.mrb[0].mxu0 %v1551
    %v2052 = vpop.f32.mrb[0].mxu0
    %v2053 = vadd.f32 %v1940, %v2052
    %v2054 = vpop.f32.mrb[0].mxu0
    %v2055 = vadd.f32 %v1942, %v2054
    %2056 = vdwg.mxu0
    %2057 = vmatprep.subr.mxu0 %v1556
    %2058 = vmatpush1.msra.mxu0 %v1555
    %2059 = vmatprep.subr.mxu0 %v1560
    %2060 = vmatpush1.msra.mxu0 %v1559
    %2061 = vmatprep.subr.mxu0 %v1564
    %2062 = vmatpush1.msra.mxu0 %v1563
    %2063 = vmatprep.subr.mxu0 %v1568
    %2064 = vmatpush1.msra.mxu0 %v1567
    %2065 = vmatprep.subr.mxu0 %v1572
    %2066 = vmatpush1.msra.mxu0 %v1571
    %2067 = vmatprep.subr.mxu0 %v1576
    %2068 = vmatpush1.msra.mxu0 %v1575
    %2069 = vmatprep.subr.mxu0 %v1580
    %2070 = vmatpush1.msra.mxu0 %v1579
    %2071 = vmatprep.subr.mxu0 %v1584
    %2072 = vmatpush1.msra.mxu0 %v1583
    %2073 = vmatprep.subr.mxu0 %v1588
    %2074 = vmatpush1.msra.mxu0 %v1587
    %2075 = vmatprep.subr.mxu0 %v1592
    %2076 = vmatpush1.msra.mxu0 %v1591
    %2077 = vmatprep.subr.mxu0 %v1596
    %2078 = vmatpush1.msra.mxu0 %v1595
    %2079 = vmatprep.subr.mxu0 %v1600
    %2080 = vmatpush1.msra.mxu0 %v1599
    %2081 = vmatprep.subr.mxu0 %v1604
    %2082 = vmatpush1.msra.mxu0 %v1603
    %2083 = vmatprep.subr.mxu0 %v1608
    %2084 = vmatpush1.msra.mxu0 %v1607
    %2085 = vmatprep.subr.mxu0 %v1612
    %2086 = vmatpush1.msra.mxu0 %v1611
    %2087 = vmatprep.subr.mxu0 %v1616
    %2088 = vmatpush1.msra.mxu0 %v1615
    %2089 = vmatprep.subr.mxu0 %v1620
    %2090 = vmatpush1.msra.mxu0 %v1619
    %2091 = vmatprep.subr.mxu0 %v1624
    %2092 = vmatpush1.msra.mxu0 %v1623
    %2093 = vmatprep.subr.mxu0 %v1628
    %2094 = vmatpush1.msra.mxu0 %v1627
    %2095 = vmatprep.subr.mxu0 %v1632
    %2096 = vmatpush1.msra.mxu0 %v1631
    %2097 = vmatprep.subr.mxu0 %v1636
    %2098 = vmatpush1.msra.mxu0 %v1635
    %2099 = vmatprep.subr.mxu0 %v1640
    %2100 = vmatpush1.msra.mxu0 %v1639
    %2101 = vmatprep.subr.mxu0 %v1644
    %2102 = vmatpush1.msra.mxu0 %v1643
    %2103 = vmatprep.subr.mxu0 %v1648
    %2104 = vmatpush1.msra.mxu0 %v1647
    %2105 = vmatprep.subr.mxu0 %v1652
    %2106 = vmatpush1.msra.mxu0 %v1651
    %2107 = vmatprep.subr.mxu0 %v1656
    %2108 = vmatpush1.msra.mxu0 %v1655
    %2109 = vmatprep.subr.mxu0 %v1660
    %2110 = vmatpush1.msra.mxu0 %v1659
    %2111 = vmatprep.subr.mxu0 %v1664
    %2112 = vmatpush1.msra.mxu0 %v1663
    %2113 = vmatprep.subr.mxu0 %v1668
    %2114 = vmatpush1.msra.mxu0 %v1667
    %2115 = vmatprep.subr.mxu0 %v1672
    %2116 = vmatpush1.msra.mxu0 %v1671
    %2117 = vmatprep.subr.mxu0 %v1676
    %2118 = vmatpush1.msra.mxu0 %v1675
    %2119 = vmatprep.subr.mxu0 %v1680
    %2120 = vmatpush1.msra.mxu0 %v1679
    %2121 = vmatprep.mubr.f32.mxu0 %v1522
    %2122 = vmatmul.mubr.f32.gmra.mrb[0].mxu0 %v1521
    %v2123 = vpop.f32.mrb[0].mxu0
    %v2124 = vadd.f32 %v1822, %v2123
    %v2125 = vpop.f32.mrb[0].mxu0
    %v2126 = vadd.f32 %v1826, %v2125
    %2127 = vmatprep.mubr.f32.mxu0 %v1526
    %2128 = vmatmul.mubr.f32.gmra.mrb[0].mxu0 %v1525
    %v2129 = vpop.f32.mrb[0].mxu0
    %v2130 = vadd.f32 %v1822, %v2129
    %v2131 = vpop.f32.mrb[0].mxu0
    %v2132 = vadd.f32 %v1826, %v2131
    %2133 = vmatprep.mubr.f32.mxu0 %v1530
    %2134 = vmatmul.mubr.f32.gmra.mrb[0].mxu0 %v1529
    %v2135 = vpop.f32.mrb[0].mxu0
    %v2136 = vadd.f32 %v1822, %v2135
    %v2137 = vpop.f32.mrb[0].mxu0
    %v2138 = vadd.f32 %v1826, %v2137
    %2139 = vmatprep.mubr.f32.mxu0 %v1534
    %2140 = vmatmul.mubr.f32.gmra.mrb[0].mxu0 %v1533
    %v2141 = vpop.f32.mrb[0].mxu0
    %v2142 = vadd.f32 %v1822, %v2141
    %v2143 = vpop.f32.mrb[0].mxu0
    %v2144 = vadd.f32 %v1826, %v2143
    %2145 = vmatprep.mubr.f32.mxu0 %v1538
    %2146 = vmatmul.mubr.f32.gmra.mrb[0].mxu0 %v1537
    %v2147 = vpop.f32.mrb[0].mxu0
    %v2148 = vadd.f32 %v1822, %v2147
    %v2149 = vpop.f32.mrb[0].mxu0
    %v2150 = vadd.f32 %v1826, %v2149
    %2151 = vmatprep.mubr.f32.mxu0 %v1542
    %2152 = vmatmul.mubr.f32.gmra.mrb[0].mxu0 %v1541
    %v2153 = vpop.f32.mrb[0].mxu0
    %v2154 = vadd.f32 %v1822, %v2153
    %v2155 = vpop.f32.mrb[0].mxu0
    %v2156 = vadd.f32 %v1826, %v2155
    %2157 = vmatprep.mubr.f32.mxu0 %v1546
    %2158 = vmatmul.mubr.f32.gmra.mrb[0].mxu0 %v1545
    %v2159 = vpop.f32.mrb[0].mxu0
    %v2160 = vadd.f32 %v1822, %v2159
    %v2161 = vpop.f32.mrb[0].mxu0
    %v2162 = vadd.f32 %v1826, %v2161
    %2163 = vmatprep.mubr.f32.mxu0 %v1550
    %2164 = vmatmul.mubr.f32.gmra.mrb[0].mxu0 %v1549
    %v2165 = vpop.f32.mrb[0].mxu0
    %v2166 = vadd.f32 %v1822, %v2165
    %v2167 = vpop.f32.mrb[0].mxu0
    %v2168 = vadd.f32 %v1826, %v2167
    %2169 = vdwg.mxu0
    %2170 = vmatprep.subr.mxu0 %v1684
    %2171 = vmatpush1.msra.mxu0 %v1683
    %2172 = vmatprep.subr.mxu0 %v1688
    %2173 = vmatpush1.msra.mxu0 %v1687
    %2174 = vmatprep.subr.mxu0 %v1692
    %2175 = vmatpush1.msra.mxu0 %v1691
    %2176 = vmatprep.subr.mxu0 %v1696
    %2177 = vmatpush1.msra.mxu0 %v1695
    %2178 = vmatprep.subr.mxu0 %v1700
    %2179 = vmatpush1.msra.mxu0 %v1699
    %2180 = vmatprep.subr.mxu0 %v1704
    %2181 = vmatpush1.msra.mxu0 %v1703
    %2182 = vmatprep.subr.mxu0 %v1708
    %2183 = vmatpush1.msra.mxu0 %v1707
    %2184 = vmatprep.subr.mxu0 %v1712
    %2185 = vmatpush1.msra.mxu0 %v1711
    %2186 = vmatprep.subr.mxu0 %v1716
    %2187 = vmatpush1.msra.mxu0 %v1715
    %2188 = vmatprep.subr.mxu0 %v1720
    %2189 = vmatpush1.msra.mxu0 %v1719
    %2190 = vmatprep.subr.mxu0 %v1724
    %2191 = vmatpush1.msra.mxu0 %v1723
    %2192 = vmatprep.subr.mxu0 %v1728
    %2193 = vmatpush1.msra.mxu0 %v1727
    %2194 = vmatprep.subr.mxu0 %v1732
    %2195 = vmatpush1.msra.mxu0 %v1731
    %2196 = vmatprep.subr.mxu0 %v1736
    %2197 = vmatpush1.msra.mxu0 %v1735
    %2198 = vmatprep.subr.mxu0 %v1740
    %2199 = vmatpush1.msra.mxu0 %v1739
    %2200 = vmatprep.subr.mxu0 %v1744
    %2201 = vmatpush1.msra.mxu0 %v1743
    %2202 = vmatprep.subr.mxu0 %v1748
    %2203 = vmatpush1.msra.mxu0 %v1747
    %2204 = vmatprep.subr.mxu0 %v1752
    %2205 = vmatpush1.msra.mxu0 %v1751
    %2206 = vmatprep.subr.mxu0 %v1756
    %2207 = vmatpush1.msra.mxu0 %v1755
    %2208 = vmatprep.subr.mxu0 %v1760
    %2209 = vmatpush1.msra.mxu0 %v1759
    %2210 = vmatprep.subr.mxu0 %v1764
    %2211 = vmatpush1.msra.mxu0 %v1763
    %2212 = vmatprep.subr.mxu0 %v1768
    %2213 = vmatpush1.msra.mxu0 %v1767
    %2214 = vmatprep.subr.mxu0 %v1772
    %2215 = vmatpush1.msra.mxu0 %v1771
    %2216 = vmatprep.subr.mxu0 %v1776
    %2217 = vmatpush1.msra.mxu0 %v1775
    %2218 = vmatprep.subr.mxu0 %v1780
    %2219 = vmatpush1.msra.mxu0 %v1779
    %2220 = vmatprep.subr.mxu0 %v1784
    %2221 = vmatpush1.msra.mxu0 %v1783
    %2222 = vmatprep.subr.mxu0 %v1788
    %2223 = vmatpush1.msra.mxu0 %v1787
    %2224 = vmatprep.subr.mxu0 %v1792
    %2225 = vmatpush1.msra.mxu0 %v1791
    %2226 = vmatprep.subr.mxu0 %v1796
    %2227 = vmatpush1.msra.mxu0 %v1795
    %2228 = vmatprep.subr.mxu0 %v1800
    %2229 = vmatpush1.msra.mxu0 %v1799
    %2230 = vmatprep.subr.mxu0 %v1804
    %2231 = vmatpush1.msra.mxu0 %v1803
    %2232 = vmatprep.subr.mxu0 %v1808
    %2233 = vmatpush1.msra.mxu0 %v1807
    %2234 = vmatprep.mubr.f32.mxu0 %v1524
    %2235 = vmatmul.mubr.f32.gmra.mrb[0].mxu0 %v1523
    %v2236 = vpop.f32.mrb[0].mxu0
    %v2237 = vadd.f32 %v2124, %v2236
    %v2238 = vpop.f32.mrb[0].mxu0
    %v2239 = vadd.f32 %v2126, %v2238
    %2240 = vmatprep.mubr.f32.mxu0 %v1528
    %2241 = vmatmul.mubr.f32.gmra.mrb[0].mxu0 %v1527
    %v2242 = vpop.f32.mrb[0].mxu0
    %v2243 = vadd.f32 %v2130, %v2242
    %v2244 = vpop.f32.mrb[0].mxu0
    %v2245 = vadd.f32 %v2132, %v2244
    %2246 = vmatprep.mubr.f32.mxu0 %v1532
    %2247 = vmatmul.mubr.f32.gmra.mrb[0].mxu0 %v1531
    %v2248 = vpop.f32.mrb[0].mxu0
    %v2249 = vadd.f32 %v2136, %v2248
    %v2250 = vpop.f32.mrb[0].mxu0
    %v2251 = vadd.f32 %v2138, %v2250
    %2252 = vmatprep.mubr.f32.mxu0 %v1536
    %2253 = vmatmul.mubr.f32.gmra.mrb[0].mxu0 %v1535
    %v2254 = vpop.f32.mrb[0].mxu0
    %v2255 = vadd.f32 %v2142, %v2254
    %v2256 = vpop.f32.mrb[0].mxu0
    %v2257 = vadd.f32 %v2144, %v2256
    %2258 = vmatprep.mubr.f32.mxu0 %v1540
    %2259 = vmatmul.mubr.f32.gmra.mrb[0].mxu0 %v1539
    %v2260 = vpop.f32.mrb[0].mxu0
    %v2261 = vadd.f32 %v2148, %v2260
    %v2262 = vpop.f32.mrb[0].mxu0
    %v2263 = vadd.f32 %v2150, %v2262
    %2264 = vmatprep.mubr.f32.mxu0 %v1544
    %2265 = vmatmul.mubr.f32.gmra.mrb[0].mxu0 %v1543
    %v2266 = vpop.f32.mrb[0].mxu0
    %v2267 = vadd.f32 %v2154, %v2266
    %v2268 = vpop.f32.mrb[0].mxu0
    %v2269 = vadd.f32 %v2156, %v2268
    %2270 = vmatprep.mubr.f32.mxu0 %v1548
    %2271 = vmatmul.mubr.f32.gmra.mrb[0].mxu0 %v1547
    %v2272 = vpop.f32.mrb[0].mxu0
    %v2273 = vadd.f32 %v2160, %v2272
    %v2274 = vpop.f32.mrb[0].mxu0
    %v2275 = vadd.f32 %v2162, %v2274
    %2276 = vmatprep.mubr.f32.mxu0 %v1552
    %2277 = vmatmul.mubr.f32.gmra.mrb[0].mxu0 %v1551
    %v2278 = vpop.f32.mrb[0].mxu0
    %v2279 = vadd.f32 %v2166, %v2278
    %v2280 = vpop.f32.mrb[0].mxu0
    %v2281 = vadd.f32 %v2168, %v2280
    %2282 = vdwg.mxu0
    %2283 = vst [vmem:[#allocation13] sm:$0xff] %v2011
    %2284 = vst [vmem:[#allocation13 + $0x8] sm:$0xff] %v2013
    %2285 = vst [vmem:[#allocation13 + $0x10] sm:$0xff] %v2237
    %2286 = vst [vmem:[#allocation13 + $0x18] sm:$0xff] %v2239
    %2287 = vst [vmem:[#allocation13 + $0x20] sm:$0xff] %v2017
    %2288 = vst [vmem:[#allocation13 + $0x28] sm:$0xff] %v2019
    %2289 = vst [vmem:[#allocation13 + $0x30] sm:$0xff] %v2243
    %2290 = vst [vmem:[#allocation13 + $0x38] sm:$0xff] %v2245
    %2291 = vst [vmem:[#allocation13 + $0x40] sm:$0xff] %v2023
    %2292 = vst [vmem:[#allocation13 + $0x48] sm:$0xff] %v2025
    %2293 = vst [vmem:[#allocation13 + $0x50] sm:$0xff] %v2249
    %2294 = vst [vmem:[#allocation13 + $0x58] sm:$0xff] %v2251
    %2295 = vst [vmem:[#allocation13 + $0x60] sm:$0xff] %v2029
    %2296 = vst [vmem:[#allocation13 + $0x68] sm:$0xff] %v2031
    %2297 = vst [vmem:[#allocation13 + $0x70] sm:$0xff] %v2255
    %2298 = vst [vmem:[#allocation13 + $0x78] sm:$0xff] %v2257
    %2299 = vst [vmem:[#allocation13 + $0x80] sm:$0xff] %v2035
    %2300 = vst [vmem:[#allocation13 + $0x88] sm:$0xff] %v2037
    %2301 = vst [vmem:[#allocation13 + $0x90] sm:$0xff] %v2261
    %2302 = vst [vmem:[#allocation13 + $0x98] sm:$0xff] %v2263
    %2303 = vst [vmem:[#allocation13 + $0xa0] sm:$0xff] %v2041
    %2304 = vst [vmem:[#allocation13 + $0xa8] sm:$0xff] %v2043
    %2305 = vst [vmem:[#allocation13 + $0xb0] sm:$0xff] %v2267
    %2306 = vst [vmem:[#allocation13 + $0xb8] sm:$0xff] %v2269
    %2307 = vst [vmem:[#allocation13 + $0xc0] sm:$0xff] %v2047
    %2308 = vst [vmem:[#allocation13 + $0xc8] sm:$0xff] %v2049
    %2309 = vst [vmem:[#allocation13 + $0xd0] sm:$0xff] %v2273
    %2310 = vst [vmem:[#allocation13 + $0xd8] sm:$0xff] %v2275
    %2311 = vst [vmem:[#allocation13 + $0xe0] sm:$0xff] %v2053
    %2312 = vst [vmem:[#allocation13 + $0xe8] sm:$0xff] %v2055
    %2313 = vst [vmem:[#allocation13 + $0xf0] sm:$0xff] %v2279
    %2314 = vst [vmem:[#allocation13 + $0xf8] sm:$0xff] %v2281
    // Predicated region
    $region46: #{tpu_custom_call.1} parent=1 // pred_check
      _
    $region47: #{tpu_custom_call.1} parent=1 // pred_check_branch
      %2316 = sbr.rel (0) target = $region49
    $region48: #{tpu_custom_call.1} parent=1 // pred_region
      %s2318 = ssub.s32 4096, 4096
      %2319 = vsyncadd [#allocation7], %s2318
      %s2320 = sshll.u32 [#allocation13], 4
      %s2321 = int_to_ptr.vmem [resolvable:$true] %s2320
      %2326 = dma.vmem_to_hbm [thread:$0]  %s2321, 4096, %s7, [#allocation7], 512, 512, 32
    $region49: #{tpu_custom_call.1} parent=1 // pred_fallthru
      _
    // Predicated region
    $region50: #{tpu_custom_call.1} parent=1 // pred_check
      _
    $region51: #{tpu_custom_call.1} parent=1 // pred_check_branch
      %2328 = sbr.rel (0) target = $region53
    $region52: #{tpu_custom_call.1} parent=1 // pred_region
      %2329 = dma.done [#allocation7], 4096
    $region53: #{tpu_custom_call.1} parent=1 // pred_fallthru
      _
    %2330 = vsyncpa [#allocation6], 1
    %2331 = vsyncpa [#allocation9], 1
    %2332 = vsyncpa [#allocation12], 1
    %2333 = vsyncpa [#allocation7], 1
  %2334 = vsyncmov [#allocation3]
  %s2335 = vpop.sfrf %2334
  %p2336 = scmp.eq.s32.totalorder %s2335, 0
  %p2337 = pneg %p2336
  %2339 = shalt.err (%p2337)

</llo_original>
